<compile_context>
chip_gen: v6e
topology: v6e:2x2x1
jax: 0.10.0
libtpu: 0.0.40
codegen_flags: <defaults>
</compile_context>

<pallas_src>
from functools import lru_cache, partial

import jax
import jax.numpy as jnp
from jax.experimental import pallas as pl
from jax.experimental.pallas import tpu as pltpu

EPS = 1e-5


# ------------------------------- fused kernel --------------------------------

def _gated_d_conv_kernel(x_ref, prm_ref, w_ref, o_ref, *, B, C, k, dilation):
    """Fused dual PReLU + InstanceNorm1d + causal dilated Conv1d + sigmoid gating.

    x_ref:   (T, B*C) f32, time-major, lane-dense; column index = b*C + c.
    prm_ref: (6, B*C) f32, rows = [alpha_m, gamma_m, beta_m, alpha_g, gamma_g, beta_g],
             already tiled over batch.
    w_ref:   (2, k, C, C) bf16; w_ref[branch, tap, c_in, c_out]
             (= PyTorch weight[c_out, c_in, tap]); branch 0 = main, 1 = gate.
    o_ref:   (T, B*C) f32 = main_conv * sigmoid(gate_conv), same layout as x_ref.
    """
    T, BC = x_ref.shape
    pad = (k - 1) * dilation

    x = x_ref[...]
    prm = prm_ref[...]

    def prelu_inorm(alpha, gamma, beta):
        y = jnp.where(x >= 0.0, x, alpha * x)                  # PReLU (per channel)
        mean = jnp.mean(y, axis=0, keepdims=True)              # sublane reduce over T
        cent = y - mean
        var = jnp.mean(cent * cent, axis=0, keepdims=True)     # biased var (PyTorch IN)
        yn = cent * jax.lax.rsqrt(var + EPS) * gamma + beta
        if pad > 0:                                            # causal left pad in time
            yn = jnp.concatenate(
                [jnp.zeros((pad, BC), jnp.float32), yn], axis=0)
        return yn                                              # (pad + T, B*C) f32

    ym = prelu_inorm(prm[0:1, :], prm[1:2, :], prm[2:3, :])    # main branch
    yg = prelu_inorm(prm[3:4, :], prm[4:5, :], prm[5:6, :])    # gate branch

    # Dilated causal conv as k shifted, accumulated MXU dots (no im2col, no
    # structural-zero block-diagonal weights).  Accumulate in f32.
    acc_m = [jnp.zeros((T, C), jnp.float32) for _ in range(B)]
    acc_g = [jnp.zeros((T, C), jnp.float32) for _ in range(B)]
    for j in range(k):
        t0 = j * dilation
        sm = ym[t0:t0 + T, :].astype(jnp.bfloat16)             # (T, B*C) tap slice
        sg = yg[t0:t0 + T, :].astype(jnp.bfloat16)
        wm = w_ref[0, j]                                       # (C, C) bf16
        wg = w_ref[1, j]
        for b in range(B):
            lo, hi = b * C, (b + 1) * C
            acc_m[b] += jnp.dot(sm[:, lo:hi], wm,
                                preferred_element_type=jnp.float32)
            acc_g[b] += jnp.dot(sg[:, lo:hi], wg,
                                preferred_element_type=jnp.float32)

    zm = jnp.concatenate(acc_m, axis=-1)                       # (T, B*C)
    zg = jnp.concatenate(acc_g, axis=-1)
    o_ref[...] = zm * jax.nn.sigmoid(zg)                       # lane-dense unmasked store


_VMEM = pl.BlockSpec(memory_space=pltpu.MemorySpace.VMEM)


@lru_cache(maxsize=None)
def _fused_call(T, B, C, k, dilation):
    kernel = partial(_gated_d_conv_kernel, B=B, C=C, k=k, dilation=dilation)
    return pl.pallas_call(
        kernel,
        out_shape=jax.ShapeDtypeStruct((T, B * C), jnp.float32),
        in_specs=[_VMEM, _VMEM, _VMEM],
        out_specs=_VMEM,
    )


# ------------------------------ parameter packing ----------------------------

def pack_gated_weights(w_main, w_gate):
    """Pack two PyTorch-layout Conv1d weights (C_out, C_in, k) into one bf16
    (2, k, C_in, C_out) array (branch 0 = main, 1 = gate) for the fused kernel."""
    w = jnp.stack([w_main, w_gate])                            # (2, C_out, C_in, k)
    return jnp.transpose(w, (0, 3, 2, 1)).astype(jnp.bfloat16)  # (2, k, C_in, C_out)


def pack_norm_params(norm_prm, batch):
    """(2, 3, C) = [main|gate] x [alpha|gamma|beta] x channel -> batch-tiled (6, B*C)
    matching the (T, B*C) column layout (column b*C + c holds the channel-c value)."""
    c = norm_prm.shape[-1]
    return jnp.tile(norm_prm.reshape(6, c), (1, batch)).astype(jnp.float32)


# ------------------------------ forward pass ---------------------------------

def gated_d_conv_forward(prm_tiled, w_packed, x, *, kernel_size, dilation):
    """prm_tiled: (6, B*C) from pack_norm_params; w_packed: (2, k, C, C) bf16 from
    pack_gated_weights; x: (B, C, T) -> (B, C, T)."""
    B, C, T = x.shape
    xt = x.reshape(B * C, T).T                                 # (T, B*C); col = b*C + c
    o = _fused_call(T, B, C, kernel_size, dilation)(xt, prm_tiled, w_packed)
    return o.T.reshape(B, C, T)


# ------------------------------ reference (pure JAX) --------------------------

def _reference_forward(norm_prm, w_main, w_gate, x, kernel_size, dilation):
    """Non-Pallas reference matching the PyTorch Gated_D_Conv forward."""
    def branch(alpha, gamma, beta, w):
        y = jnp.where(x >= 0.0, x, alpha[None, :, None] * x)
        mean = jnp.mean(y, axis=-1, keepdims=True)
        var = jnp.mean((y - mean) ** 2, axis=-1, keepdims=True)
        yn = (y - mean) / jnp.sqrt(var + EPS)
        yn = yn * gamma[None, :, None] + beta[None, :, None]
        pad = (kernel_size - 1) * dilation
        yp = jnp.pad(yn, ((0, 0), (0, 0), (pad, 0)))
        return jax.lax.conv_general_dilated(
            yp, w, window_strides=(1,), padding='VALID',
            rhs_dilation=(dilation,), dimension_numbers=('NCH', 'OIH', 'NCH'))

    zm = branch(norm_prm[0, 0], norm_prm[0, 1], norm_prm[0, 2], w_main)
    zg = branch(norm_prm[1, 0], norm_prm[1, 1], norm_prm[1, 2], w_gate)
    return zm * jax.nn.sigmoid(zg)


# ------------------------------ parameters -----------------------------------

def init_params(key, channels=64, kernel_size=5):
    ks = jax.random.split(key, 6)

    def rnd(k_, shape, scale):
        return (scale * jax.random.normal(k_, shape)).astype(jnp.float32)

    def branch_norm(kg, kb):
        return jnp.stack([jnp.full((channels,), 0.25, jnp.float32),   # PReLU alpha
                          1.0 + rnd(kg, (channels,), 0.1),            # IN gamma
                          rnd(kb, (channels,), 0.1)])                 # IN beta

    norm = jnp.stack([branch_norm(ks[0], ks[1]),
                      branch_norm(ks[2], ks[3])])                     # (2, 3, C)
    # PyTorch Conv1d layout (C_out, C_in, k), bias=False.
    w_main = rnd(ks[4], (channels, channels, kernel_size), 0.05)
    w_gate = rnd(ks[5], (channels, channels, kernel_size), 0.05)
    return dict(norm=norm, w_main=w_main, w_gate=w_gate)


# --------------------------------- main --------------------------------------

if __name__ == "__main__":
    key = jax.random.PRNGKey(0)
    kp, kx = jax.random.split(key)

    B, C, T = 2, 64, 8               # PReLU(64) in the reference module fixes C = 64
    kernel_size, dilation = 5, 2

    params = init_params(kp, C, kernel_size)
    x = jax.random.normal(kx, (B, C, T), jnp.float32)

    # Packed once (would be done at module-init time in a real model).
    prm_tiled = pack_norm_params(params['norm'], B)            # (6, B*C)
    w_packed = pack_gated_weights(params['w_main'], params['w_gate'])  # (2, k, C, C) bf16

    fwd = jax.jit(partial(gated_d_conv_forward,
                          kernel_size=kernel_size, dilation=dilation))
    out = jax.block_until_ready(fwd(prm_tiled, w_packed, x))

    assert out.shape == (B, C, T), out.shape
    assert bool(jnp.all(jnp.isfinite(out)))

    # Correctness check against a pure-JAX reference (tolerance covers the bf16 MXU
    # operand precision, which matches the TPU default-precision f32 matmul path).
    ref = _reference_forward(params['norm'], params['w_main'], params['w_gate'],
                             x, kernel_size, dilation)
    max_err = float(jnp.max(jnp.abs(out - ref)))
    assert max_err < 2e-2, max_err

    print("KERNEL_OK")
</pallas_src>

<mosaic_0001>
module attributes {stable_mosaic.version = 11 : i64} {
  func.func @_gated_d_conv_kernel(%arg0: memref<8x128xf32, #tpu.memory_space<vmem>>, %arg1: memref<6x128xf32, #tpu.memory_space<vmem>>, %arg2: memref<2x5x64x64xbf16, #tpu.memory_space<vmem>>, %arg3: memref<8x128xf32, #tpu.memory_space<vmem>>) attributes {dimension_semantics = [], scalar_prefetch = 0 : i64, scratch_operands = 0 : i64, tpu.core_type = #tpu.core_type<tc>} {
    %c0 = arith.constant 0 : index
    %c0_0 = arith.constant 0 : index
    %0 = vector.load %arg0[%c0, %c0_0] : memref<8x128xf32, #tpu.memory_space<vmem>>, vector<8x128xf32>
    %c0_1 = arith.constant 0 : index
    %c0_2 = arith.constant 0 : index
    %1 = vector.load %arg1[%c0_1, %c0_2] : memref<6x128xf32, #tpu.memory_space<vmem>>, vector<6x128xf32>
    %2 = vector.extract_strided_slice %1 {offsets = [0, 0], sizes = [1, 128], strides = [1, 1]} : vector<6x128xf32> to vector<1x128xf32>
    %3 = vector.extract_strided_slice %1 {offsets = [1, 0], sizes = [1, 128], strides = [1, 1]} : vector<6x128xf32> to vector<1x128xf32>
    %4 = vector.extract_strided_slice %1 {offsets = [2, 0], sizes = [1, 128], strides = [1, 1]} : vector<6x128xf32> to vector<1x128xf32>
    %cst = arith.constant 0.000000e+00 : f32
    %5 = vector.broadcast %cst : f32 to vector<8x128xf32>
    %6 = arith.cmpf oge, %0, %5 : vector<8x128xf32>
    %7 = vector.broadcast %2 : vector<1x128xf32> to vector<8x128xf32>
    %8 = arith.mulf %7, %0 : vector<8x128xf32>
    %9 = arith.select %6, %0, %8 : vector<8x128xi1>, vector<8x128xf32>
    %cst_3 = arith.constant dense<0.000000e+00> : vector<128xf32>
    %10 = vector.multi_reduction <add>, %9, %cst_3 [0] : vector<8x128xf32> to vector<128xf32>
    %11 = vector.shape_cast %10 : vector<128xf32> to vector<1x128xf32>
    %cst_4 = arith.constant 8.000000e+00 : f32
    %12 = vector.broadcast %cst_4 : f32 to vector<1x128xf32>
    %13 = arith.divf %11, %12 : vector<1x128xf32>
    %14 = vector.broadcast %13 : vector<1x128xf32> to vector<8x128xf32>
    %15 = arith.subf %9, %14 : vector<8x128xf32>
    %16 = arith.mulf %15, %15 : vector<8x128xf32>
    %cst_5 = arith.constant dense<0.000000e+00> : vector<128xf32>
    %17 = vector.multi_reduction <add>, %16, %cst_5 [0] : vector<8x128xf32> to vector<128xf32>
    %18 = vector.shape_cast %17 : vector<128xf32> to vector<1x128xf32>
    %cst_6 = arith.constant 8.000000e+00 : f32
    %19 = vector.broadcast %cst_6 : f32 to vector<1x128xf32>
    %20 = arith.divf %18, %19 : vector<1x128xf32>
    %cst_7 = arith.constant 9.99999974E-6 : f32
    %21 = vector.broadcast %cst_7 : f32 to vector<1x128xf32>
    %22 = arith.addf %20, %21 : vector<1x128xf32>
    %23 = math.rsqrt %22 : vector<1x128xf32>
    %24 = vector.broadcast %23 : vector<1x128xf32> to vector<8x128xf32>
    %25 = arith.mulf %15, %24 : vector<8x128xf32>
    %26 = vector.broadcast %3 : vector<1x128xf32> to vector<8x128xf32>
    %27 = arith.mulf %25, %26 : vector<8x128xf32>
    %28 = vector.broadcast %4 : vector<1x128xf32> to vector<8x128xf32>
    %29 = arith.addf %27, %28 : vector<8x128xf32>
    %cst_8 = arith.constant 0.000000e+00 : f32
    %30 = vector.broadcast %cst_8 : f32 to vector<8x128xf32>
    %31 = tpu.concatenate %30, %29 in 0 : vector<8x128xf32>, vector<8x128xf32> -> vector<16x128xf32>
    %32 = vector.extract_strided_slice %1 {offsets = [3, 0], sizes = [1, 128], strides = [1, 1]} : vector<6x128xf32> to vector<1x128xf32>
    %33 = vector.extract_strided_slice %1 {offsets = [4, 0], sizes = [1, 128], strides = [1, 1]} : vector<6x128xf32> to vector<1x128xf32>
    %34 = vector.extract_strided_slice %1 {offsets = [5, 0], sizes = [1, 128], strides = [1, 1]} : vector<6x128xf32> to vector<1x128xf32>
    %cst_9 = arith.constant 0.000000e+00 : f32
    %35 = vector.broadcast %cst_9 : f32 to vector<8x128xf32>
    %36 = arith.cmpf oge, %0, %35 : vector<8x128xf32>
    %37 = vector.broadcast %32 : vector<1x128xf32> to vector<8x128xf32>
    %38 = arith.mulf %37, %0 : vector<8x128xf32>
    %39 = arith.select %36, %0, %38 : vector<8x128xi1>, vector<8x128xf32>
    %cst_10 = arith.constant dense<0.000000e+00> : vector<128xf32>
    %40 = vector.multi_reduction <add>, %39, %cst_10 [0] : vector<8x128xf32> to vector<128xf32>
    %41 = vector.shape_cast %40 : vector<128xf32> to vector<1x128xf32>
    %cst_11 = arith.constant 8.000000e+00 : f32
    %42 = vector.broadcast %cst_11 : f32 to vector<1x128xf32>
    %43 = arith.divf %41, %42 : vector<1x128xf32>
    %44 = vector.broadcast %43 : vector<1x128xf32> to vector<8x128xf32>
    %45 = arith.subf %39, %44 : vector<8x128xf32>
    %46 = arith.mulf %45, %45 : vector<8x128xf32>
    %cst_12 = arith.constant dense<0.000000e+00> : vector<128xf32>
    %47 = vector.multi_reduction <add>, %46, %cst_12 [0] : vector<8x128xf32> to vector<128xf32>
    %48 = vector.shape_cast %47 : vector<128xf32> to vector<1x128xf32>
    %cst_13 = arith.constant 8.000000e+00 : f32
    %49 = vector.broadcast %cst_13 : f32 to vector<1x128xf32>
    %50 = arith.divf %48, %49 : vector<1x128xf32>
    %cst_14 = arith.constant 9.99999974E-6 : f32
    %51 = vector.broadcast %cst_14 : f32 to vector<1x128xf32>
    %52 = arith.addf %50, %51 : vector<1x128xf32>
    %53 = math.rsqrt %52 : vector<1x128xf32>
    %54 = vector.broadcast %53 : vector<1x128xf32> to vector<8x128xf32>
    %55 = arith.mulf %45, %54 : vector<8x128xf32>
    %56 = vector.broadcast %33 : vector<1x128xf32> to vector<8x128xf32>
    %57 = arith.mulf %55, %56 : vector<8x128xf32>
    %58 = vector.broadcast %34 : vector<1x128xf32> to vector<8x128xf32>
    %59 = arith.addf %57, %58 : vector<8x128xf32>
    %cst_15 = arith.constant 0.000000e+00 : f32
    %60 = vector.broadcast %cst_15 : f32 to vector<8x128xf32>
    %61 = tpu.concatenate %60, %59 in 0 : vector<8x128xf32>, vector<8x128xf32> -> vector<16x128xf32>
    %cst_16 = arith.constant 0.000000e+00 : f32
    %62 = vector.broadcast %cst_16 : f32 to vector<8x64xf32>
    %cst_17 = arith.constant 0.000000e+00 : f32
    %63 = vector.broadcast %cst_17 : f32 to vector<8x64xf32>
    %cst_18 = arith.constant 0.000000e+00 : f32
    %64 = vector.broadcast %cst_18 : f32 to vector<8x64xf32>
    %cst_19 = arith.constant 0.000000e+00 : f32
    %65 = vector.broadcast %cst_19 : f32 to vector<8x64xf32>
    %66 = vector.extract_strided_slice %31 {offsets = [0, 0], sizes = [8, 128], strides = [1, 1]} : vector<16x128xf32> to vector<8x128xf32>
    %67 = arith.truncf %66 : vector<8x128xf32> to vector<8x128xbf16>
    %68 = vector.extract_strided_slice %61 {offsets = [0, 0], sizes = [8, 128], strides = [1, 1]} : vector<16x128xf32> to vector<8x128xf32>
    %69 = arith.truncf %68 : vector<8x128xf32> to vector<8x128xbf16>
    %c0_20 = arith.constant 0 : index
    %c0_21 = arith.constant 0 : index
    %c0_22 = arith.constant 0 : index
    %c0_23 = arith.constant 0 : index
    %70 = vector.load %arg2[%c0_20, %c0_21, %c0_22, %c0_23] : memref<2x5x64x64xbf16, #tpu.memory_space<vmem>>, vector<1x1x64x64xbf16>
    %71 = vector.shape_cast %70 : vector<1x1x64x64xbf16> to vector<64x64xbf16>
    %c1 = arith.constant 1 : index
    %c0_24 = arith.constant 0 : index
    %c0_25 = arith.constant 0 : index
    %c0_26 = arith.constant 0 : index
    %72 = vector.load %arg2[%c1, %c0_24, %c0_25, %c0_26] : memref<2x5x64x64xbf16, #tpu.memory_space<vmem>>, vector<1x1x64x64xbf16>
    %73 = vector.shape_cast %72 : vector<1x1x64x64xbf16> to vector<64x64xbf16>
    %74 = vector.extract_strided_slice %67 {offsets = [0, 0], sizes = [8, 64], strides = [1, 1]} : vector<8x128xbf16> to vector<8x64xbf16>
    %cst_27 = arith.constant dense<0.000000e+00> : vector<8x64xf32>
    %75 = tpu.matmul %74, %71, %cst_27 {dimension_numbers = #tpu.dot_dimension_numbers<[1], [0], [0], [1], [0, 0, 1, 1], [], []>} : vector<8x64xbf16>, vector<64x64xbf16>, vector<8x64xf32> -> vector<8x64xf32>
    %76 = arith.addf %62, %75 : vector<8x64xf32>
    %77 = vector.extract_strided_slice %69 {offsets = [0, 0], sizes = [8, 64], strides = [1, 1]} : vector<8x128xbf16> to vector<8x64xbf16>
    %cst_28 = arith.constant dense<0.000000e+00> : vector<8x64xf32>
    %78 = tpu.matmul %77, %73, %cst_28 {dimension_numbers = #tpu.dot_dimension_numbers<[1], [0], [0], [1], [0, 0, 1, 1], [], []>} : vector<8x64xbf16>, vector<64x64xbf16>, vector<8x64xf32> -> vector<8x64xf32>
    %79 = arith.addf %64, %78 : vector<8x64xf32>
    %80 = vector.extract_strided_slice %67 {offsets = [0, 64], sizes = [8, 64], strides = [1, 1]} : vector<8x128xbf16> to vector<8x64xbf16>
    %cst_29 = arith.constant dense<0.000000e+00> : vector<8x64xf32>
    %81 = tpu.matmul %80, %71, %cst_29 {dimension_numbers = #tpu.dot_dimension_numbers<[1], [0], [0], [1], [0, 0, 1, 1], [], []>} : vector<8x64xbf16>, vector<64x64xbf16>, vector<8x64xf32> -> vector<8x64xf32>
    %82 = arith.addf %63, %81 : vector<8x64xf32>
    %83 = vector.extract_strided_slice %69 {offsets = [0, 64], sizes = [8, 64], strides = [1, 1]} : vector<8x128xbf16> to vector<8x64xbf16>
    %cst_30 = arith.constant dense<0.000000e+00> : vector<8x64xf32>
    %84 = tpu.matmul %83, %73, %cst_30 {dimension_numbers = #tpu.dot_dimension_numbers<[1], [0], [0], [1], [0, 0, 1, 1], [], []>} : vector<8x64xbf16>, vector<64x64xbf16>, vector<8x64xf32> -> vector<8x64xf32>
    %85 = arith.addf %65, %84 : vector<8x64xf32>
    %86 = vector.extract_strided_slice %31 {offsets = [2, 0], sizes = [8, 128], strides = [1, 1]} : vector<16x128xf32> to vector<8x128xf32>
    %87 = arith.truncf %86 : vector<8x128xf32> to vector<8x128xbf16>
    %88 = vector.extract_strided_slice %61 {offsets = [2, 0], sizes = [8, 128], strides = [1, 1]} : vector<16x128xf32> to vector<8x128xf32>
    %89 = arith.truncf %88 : vector<8x128xf32> to vector<8x128xbf16>
    %c0_31 = arith.constant 0 : index
    %c1_32 = arith.constant 1 : index
    %c0_33 = arith.constant 0 : index
    %c0_34 = arith.constant 0 : index
    %90 = vector.load %arg2[%c0_31, %c1_32, %c0_33, %c0_34] : memref<2x5x64x64xbf16, #tpu.memory_space<vmem>>, vector<1x1x64x64xbf16>
    %91 = vector.shape_cast %90 : vector<1x1x64x64xbf16> to vector<64x64xbf16>
    %c1_35 = arith.constant 1 : index
    %c1_36 = arith.constant 1 : index
    %c0_37 = arith.constant 0 : index
    %c0_38 = arith.constant 0 : index
    %92 = vector.load %arg2[%c1_35, %c1_36, %c0_37, %c0_38] : memref<2x5x64x64xbf16, #tpu.memory_space<vmem>>, vector<1x1x64x64xbf16>
    %93 = vector.shape_cast %92 : vector<1x1x64x64xbf16> to vector<64x64xbf16>
    %94 = vector.extract_strided_slice %87 {offsets = [0, 0], sizes = [8, 64], strides = [1, 1]} : vector<8x128xbf16> to vector<8x64xbf16>
    %cst_39 = arith.constant dense<0.000000e+00> : vector<8x64xf32>
    %95 = tpu.matmul %94, %91, %cst_39 {dimension_numbers = #tpu.dot_dimension_numbers<[1], [0], [0], [1], [0, 0, 1, 1], [], []>} : vector<8x64xbf16>, vector<64x64xbf16>, vector<8x64xf32> -> vector<8x64xf32>
    %96 = arith.addf %76, %95 : vector<8x64xf32>
    %97 = vector.extract_strided_slice %89 {offsets = [0, 0], sizes = [8, 64], strides = [1, 1]} : vector<8x128xbf16> to vector<8x64xbf16>
    %cst_40 = arith.constant dense<0.000000e+00> : vector<8x64xf32>
    %98 = tpu.matmul %97, %93, %cst_40 {dimension_numbers = #tpu.dot_dimension_numbers<[1], [0], [0], [1], [0, 0, 1, 1], [], []>} : vector<8x64xbf16>, vector<64x64xbf16>, vector<8x64xf32> -> vector<8x64xf32>
    %99 = arith.addf %79, %98 : vector<8x64xf32>
    %100 = vector.extract_strided_slice %87 {offsets = [0, 64], sizes = [8, 64], strides = [1, 1]} : vector<8x128xbf16> to vector<8x64xbf16>
    %cst_41 = arith.constant dense<0.000000e+00> : vector<8x64xf32>
    %101 = tpu.matmul %100, %91, %cst_41 {dimension_numbers = #tpu.dot_dimension_numbers<[1], [0], [0], [1], [0, 0, 1, 1], [], []>} : vector<8x64xbf16>, vector<64x64xbf16>, vector<8x64xf32> -> vector<8x64xf32>
    %102 = arith.addf %82, %101 : vector<8x64xf32>
    %103 = vector.extract_strided_slice %89 {offsets = [0, 64], sizes = [8, 64], strides = [1, 1]} : vector<8x128xbf16> to vector<8x64xbf16>
    %cst_42 = arith.constant dense<0.000000e+00> : vector<8x64xf32>
    %104 = tpu.matmul %103, %93, %cst_42 {dimension_numbers = #tpu.dot_dimension_numbers<[1], [0], [0], [1], [0, 0, 1, 1], [], []>} : vector<8x64xbf16>, vector<64x64xbf16>, vector<8x64xf32> -> vector<8x64xf32>
    %105 = arith.addf %85, %104 : vector<8x64xf32>
    %106 = vector.extract_strided_slice %31 {offsets = [4, 0], sizes = [8, 128], strides = [1, 1]} : vector<16x128xf32> to vector<8x128xf32>
    %107 = arith.truncf %106 : vector<8x128xf32> to vector<8x128xbf16>
    %108 = vector.extract_strided_slice %61 {offsets = [4, 0], sizes = [8, 128], strides = [1, 1]} : vector<16x128xf32> to vector<8x128xf32>
    %109 = arith.truncf %108 : vector<8x128xf32> to vector<8x128xbf16>
    %c0_43 = arith.constant 0 : index
    %c2 = arith.constant 2 : index
    %c0_44 = arith.constant 0 : index
    %c0_45 = arith.constant 0 : index
    %110 = vector.load %arg2[%c0_43, %c2, %c0_44, %c0_45] : memref<2x5x64x64xbf16, #tpu.memory_space<vmem>>, vector<1x1x64x64xbf16>
    %111 = vector.shape_cast %110 : vector<1x1x64x64xbf16> to vector<64x64xbf16>
    %c1_46 = arith.constant 1 : index
    %c2_47 = arith.constant 2 : index
    %c0_48 = arith.constant 0 : index
    %c0_49 = arith.constant 0 : index
    %112 = vector.load %arg2[%c1_46, %c2_47, %c0_48, %c0_49] : memref<2x5x64x64xbf16, #tpu.memory_space<vmem>>, vector<1x1x64x64xbf16>
    %113 = vector.shape_cast %112 : vector<1x1x64x64xbf16> to vector<64x64xbf16>
    %114 = vector.extract_strided_slice %107 {offsets = [0, 0], sizes = [8, 64], strides = [1, 1]} : vector<8x128xbf16> to vector<8x64xbf16>
    %cst_50 = arith.constant dense<0.000000e+00> : vector<8x64xf32>
    %115 = tpu.matmul %114, %111, %cst_50 {dimension_numbers = #tpu.dot_dimension_numbers<[1], [0], [0], [1], [0, 0, 1, 1], [], []>} : vector<8x64xbf16>, vector<64x64xbf16>, vector<8x64xf32> -> vector<8x64xf32>
    %116 = arith.addf %96, %115 : vector<8x64xf32>
    %117 = vector.extract_strided_slice %109 {offsets = [0, 0], sizes = [8, 64], strides = [1, 1]} : vector<8x128xbf16> to vector<8x64xbf16>
    %cst_51 = arith.constant dense<0.000000e+00> : vector<8x64xf32>
    %118 = tpu.matmul %117, %113, %cst_51 {dimension_numbers = #tpu.dot_dimension_numbers<[1], [0], [0], [1], [0, 0, 1, 1], [], []>} : vector<8x64xbf16>, vector<64x64xbf16>, vector<8x64xf32> -> vector<8x64xf32>
    %119 = arith.addf %99, %118 : vector<8x64xf32>
    %120 = vector.extract_strided_slice %107 {offsets = [0, 64], sizes = [8, 64], strides = [1, 1]} : vector<8x128xbf16> to vector<8x64xbf16>
    %cst_52 = arith.constant dense<0.000000e+00> : vector<8x64xf32>
    %121 = tpu.matmul %120, %111, %cst_52 {dimension_numbers = #tpu.dot_dimension_numbers<[1], [0], [0], [1], [0, 0, 1, 1], [], []>} : vector<8x64xbf16>, vector<64x64xbf16>, vector<8x64xf32> -> vector<8x64xf32>
    %122 = arith.addf %102, %121 : vector<8x64xf32>
    %123 = vector.extract_strided_slice %109 {offsets = [0, 64], sizes = [8, 64], strides = [1, 1]} : vector<8x128xbf16> to vector<8x64xbf16>
    %cst_53 = arith.constant dense<0.000000e+00> : vector<8x64xf32>
    %124 = tpu.matmul %123, %113, %cst_53 {dimension_numbers = #tpu.dot_dimension_numbers<[1], [0], [0], [1], [0, 0, 1, 1], [], []>} : vector<8x64xbf16>, vector<64x64xbf16>, vector<8x64xf32> -> vector<8x64xf32>
    %125 = arith.addf %105, %124 : vector<8x64xf32>
    %126 = vector.extract_strided_slice %31 {offsets = [6, 0], sizes = [8, 128], strides = [1, 1]} : vector<16x128xf32> to vector<8x128xf32>
    %127 = arith.truncf %126 : vector<8x128xf32> to vector<8x128xbf16>
    %128 = vector.extract_strided_slice %61 {offsets = [6, 0], sizes = [8, 128], strides = [1, 1]} : vector<16x128xf32> to vector<8x128xf32>
    %129 = arith.truncf %128 : vector<8x128xf32> to vector<8x128xbf16>
    %c0_54 = arith.constant 0 : index
    %c3 = arith.constant 3 : index
    %c0_55 = arith.constant 0 : index
    %c0_56 = arith.constant 0 : index
    %130 = vector.load %arg2[%c0_54, %c3, %c0_55, %c0_56] : memref<2x5x64x64xbf16, #tpu.memory_space<vmem>>, vector<1x1x64x64xbf16>
    %131 = vector.shape_cast %130 : vector<1x1x64x64xbf16> to vector<64x64xbf16>
    %c1_57 = arith.constant 1 : index
    %c3_58 = arith.constant 3 : index
    %c0_59 = arith.constant 0 : index
    %c0_60 = arith.constant 0 : index
    %132 = vector.load %arg2[%c1_57, %c3_58, %c0_59, %c0_60] : memref<2x5x64x64xbf16, #tpu.memory_space<vmem>>, vector<1x1x64x64xbf16>
    %133 = vector.shape_cast %132 : vector<1x1x64x64xbf16> to vector<64x64xbf16>
    %134 = vector.extract_strided_slice %127 {offsets = [0, 0], sizes = [8, 64], strides = [1, 1]} : vector<8x128xbf16> to vector<8x64xbf16>
    %cst_61 = arith.constant dense<0.000000e+00> : vector<8x64xf32>
    %135 = tpu.matmul %134, %131, %cst_61 {dimension_numbers = #tpu.dot_dimension_numbers<[1], [0], [0], [1], [0, 0, 1, 1], [], []>} : vector<8x64xbf16>, vector<64x64xbf16>, vector<8x64xf32> -> vector<8x64xf32>
    %136 = arith.addf %116, %135 : vector<8x64xf32>
    %137 = vector.extract_strided_slice %129 {offsets = [0, 0], sizes = [8, 64], strides = [1, 1]} : vector<8x128xbf16> to vector<8x64xbf16>
    %cst_62 = arith.constant dense<0.000000e+00> : vector<8x64xf32>
    %138 = tpu.matmul %137, %133, %cst_62 {dimension_numbers = #tpu.dot_dimension_numbers<[1], [0], [0], [1], [0, 0, 1, 1], [], []>} : vector<8x64xbf16>, vector<64x64xbf16>, vector<8x64xf32> -> vector<8x64xf32>
    %139 = arith.addf %119, %138 : vector<8x64xf32>
    %140 = vector.extract_strided_slice %127 {offsets = [0, 64], sizes = [8, 64], strides = [1, 1]} : vector<8x128xbf16> to vector<8x64xbf16>
    %cst_63 = arith.constant dense<0.000000e+00> : vector<8x64xf32>
    %141 = tpu.matmul %140, %131, %cst_63 {dimension_numbers = #tpu.dot_dimension_numbers<[1], [0], [0], [1], [0, 0, 1, 1], [], []>} : vector<8x64xbf16>, vector<64x64xbf16>, vector<8x64xf32> -> vector<8x64xf32>
    %142 = arith.addf %122, %141 : vector<8x64xf32>
    %143 = vector.extract_strided_slice %129 {offsets = [0, 64], sizes = [8, 64], strides = [1, 1]} : vector<8x128xbf16> to vector<8x64xbf16>
    %cst_64 = arith.constant dense<0.000000e+00> : vector<8x64xf32>
    %144 = tpu.matmul %143, %133, %cst_64 {dimension_numbers = #tpu.dot_dimension_numbers<[1], [0], [0], [1], [0, 0, 1, 1], [], []>} : vector<8x64xbf16>, vector<64x64xbf16>, vector<8x64xf32> -> vector<8x64xf32>
    %145 = arith.addf %125, %144 : vector<8x64xf32>
    %146 = vector.extract_strided_slice %31 {offsets = [8, 0], sizes = [8, 128], strides = [1, 1]} : vector<16x128xf32> to vector<8x128xf32>
    %147 = arith.truncf %146 : vector<8x128xf32> to vector<8x128xbf16>
    %148 = vector.extract_strided_slice %61 {offsets = [8, 0], sizes = [8, 128], strides = [1, 1]} : vector<16x128xf32> to vector<8x128xf32>
    %149 = arith.truncf %148 : vector<8x128xf32> to vector<8x128xbf16>
    %c0_65 = arith.constant 0 : index
    %c4 = arith.constant 4 : index
    %c0_66 = arith.constant 0 : index
    %c0_67 = arith.constant 0 : index
    %150 = vector.load %arg2[%c0_65, %c4, %c0_66, %c0_67] : memref<2x5x64x64xbf16, #tpu.memory_space<vmem>>, vector<1x1x64x64xbf16>
    %151 = vector.shape_cast %150 : vector<1x1x64x64xbf16> to vector<64x64xbf16>
    %c1_68 = arith.constant 1 : index
    %c4_69 = arith.constant 4 : index
    %c0_70 = arith.constant 0 : index
    %c0_71 = arith.constant 0 : index
    %152 = vector.load %arg2[%c1_68, %c4_69, %c0_70, %c0_71] : memref<2x5x64x64xbf16, #tpu.memory_space<vmem>>, vector<1x1x64x64xbf16>
    %153 = vector.shape_cast %152 : vector<1x1x64x64xbf16> to vector<64x64xbf16>
    %154 = vector.extract_strided_slice %147 {offsets = [0, 0], sizes = [8, 64], strides = [1, 1]} : vector<8x128xbf16> to vector<8x64xbf16>
    %cst_72 = arith.constant dense<0.000000e+00> : vector<8x64xf32>
    %155 = tpu.matmul %154, %151, %cst_72 {dimension_numbers = #tpu.dot_dimension_numbers<[1], [0], [0], [1], [0, 0, 1, 1], [], []>} : vector<8x64xbf16>, vector<64x64xbf16>, vector<8x64xf32> -> vector<8x64xf32>
    %156 = arith.addf %136, %155 : vector<8x64xf32>
    %157 = vector.extract_strided_slice %149 {offsets = [0, 0], sizes = [8, 64], strides = [1, 1]} : vector<8x128xbf16> to vector<8x64xbf16>
    %cst_73 = arith.constant dense<0.000000e+00> : vector<8x64xf32>
    %158 = tpu.matmul %157, %153, %cst_73 {dimension_numbers = #tpu.dot_dimension_numbers<[1], [0], [0], [1], [0, 0, 1, 1], [], []>} : vector<8x64xbf16>, vector<64x64xbf16>, vector<8x64xf32> -> vector<8x64xf32>
    %159 = arith.addf %139, %158 : vector<8x64xf32>
    %160 = vector.extract_strided_slice %147 {offsets = [0, 64], sizes = [8, 64], strides = [1, 1]} : vector<8x128xbf16> to vector<8x64xbf16>
    %cst_74 = arith.constant dense<0.000000e+00> : vector<8x64xf32>
    %161 = tpu.matmul %160, %151, %cst_74 {dimension_numbers = #tpu.dot_dimension_numbers<[1], [0], [0], [1], [0, 0, 1, 1], [], []>} : vector<8x64xbf16>, vector<64x64xbf16>, vector<8x64xf32> -> vector<8x64xf32>
    %162 = arith.addf %142, %161 : vector<8x64xf32>
    %163 = vector.extract_strided_slice %149 {offsets = [0, 64], sizes = [8, 64], strides = [1, 1]} : vector<8x128xbf16> to vector<8x64xbf16>
    %cst_75 = arith.constant dense<0.000000e+00> : vector<8x64xf32>
    %164 = tpu.matmul %163, %153, %cst_75 {dimension_numbers = #tpu.dot_dimension_numbers<[1], [0], [0], [1], [0, 0, 1, 1], [], []>} : vector<8x64xbf16>, vector<64x64xbf16>, vector<8x64xf32> -> vector<8x64xf32>
    %165 = arith.addf %145, %164 : vector<8x64xf32>
    %166 = tpu.concatenate %156, %162 in 1 : vector<8x64xf32>, vector<8x64xf32> -> vector<8x128xf32>
    %167 = tpu.concatenate %159, %165 in 1 : vector<8x64xf32>, vector<8x64xf32> -> vector<8x128xf32>
    %168 = arith.negf %167 : vector<8x128xf32>
    %169 = math.exp %168 : vector<8x128xf32>
    %cst_76 = arith.constant 1.000000e+00 : f32
    %170 = vector.broadcast %cst_76 : f32 to vector<8x128xf32>
    %171 = arith.addf %170, %169 : vector<8x128xf32>
    %172 = arith.divf %170, %171 : vector<8x128xf32>
    %173 = arith.mulf %166, %172 : vector<8x128xf32>
    %c0_77 = arith.constant 0 : index
    %c0_78 = arith.constant 0 : index
    %174 = vector.load %arg3[%c0_77, %c0_78] : memref<8x128xf32, #tpu.memory_space<vmem>>, vector<8x128xf32>
    tpu.vector_store %arg3[%c0_77, %c0_78], %173 {strides = array<i32>} : memref<8x128xf32, #tpu.memory_space<vmem>>, vector<8x128xf32>,
    return
  }
}

</mosaic_0001>

<llo_original>
// kernel: gated_d_conv_forward.1
$region0: #{gated_d_conv_forward.1}
  #allocation0 [shape = 'u32[]', space=smem, size = 0x4, offset = 0x4, fixed_abs, tag = 'smem constant byte address 0x4 - core index']
  #allocation1 [shape = 'u32[144,128]{1,0:T(1,128)}', space=vmem, size = 0x12000, scoped, tag = 'internal scratch']
  %s0 = inlined_call_operand.vmem [shape: f32[8,128], index: 0, kind: input, shape index: {}]
  %s1 = inlined_call_operand.vmem [shape: f32[6,128], index: 1, kind: input, shape index: {}]
  %s2 = inlined_call_operand.hbm [shape: bf16[2,5,64,64], index: 2, kind: input, shape index: {}]
  %s3 = inlined_call_operand.vmem [shape: f32[8,128], index: 3, kind: output, shape index: {}]
  %s4 = sld [smem:[#allocation0]]
  $region26: #{gated_d_conv_forward.1} parent=0
    _
  %s6 = ssub.s32 1, %s4
  %s7 = scalar_select 0, %s6, %s4
  $region1: #{gated_d_conv_forward.1} parent=0
    #allocation2 [shape = 'u8[163840]{0}', space=vmem, size = 0x28000, scoped, tag = 'input window, operand 2, single buffered']
    #allocation3 [shape = 's32[1]{0}', space=sflag, size = 0x4, scoped, tag = 'scoped memory for gated_d_conv_forward.1']
    %8 = vsyncpa [#allocation3], 0
    // Predicated region
    $region2: #{gated_d_conv_forward.1} parent=1 // pred_check
      _
    $region3: #{gated_d_conv_forward.1} parent=1 // pred_check_branch
      %10 = sbr.rel (0) target = $region5
    $region4: #{gated_d_conv_forward.1} parent=1 // pred_region
      _
    $region5: #{gated_d_conv_forward.1} parent=1 // pred_fallthru
      _
    // Predicated region
    $region6: #{gated_d_conv_forward.1} parent=1 // pred_check
      _
    $region7: #{gated_d_conv_forward.1} parent=1 // pred_check_branch
      %12 = sbr.rel (0) target = $region9
    $region8: #{gated_d_conv_forward.1} parent=1 // pred_region
      _
    $region9: #{gated_d_conv_forward.1} parent=1 // pred_fallthru
      _
    // Predicated region
    $region10: #{gated_d_conv_forward.1} parent=1 // pred_check
      _
    $region11: #{gated_d_conv_forward.1} parent=1 // pred_check_branch
      %14 = sbr.rel (0) target = $region13
    $region12: #{gated_d_conv_forward.1} parent=1 // pred_region
      %s16 = ssub.s32 5120, 5120
      %17 = vsyncadd [#allocation3], %s16
      %s18 = sshll.u32 [#allocation2], 4
      %s19 = int_to_ptr.vmem [resolvable:$true] %s18
      %24 = dma.hbm_to_vmem [thread:$0]  %s2, 5120, %s19, [#allocation3], 64, 64, 4
    $region13: #{gated_d_conv_forward.1} parent=1 // pred_fallthru
      _
    // Predicated region
    $region14: #{gated_d_conv_forward.1} parent=1 // pred_check
      _
    $region15: #{gated_d_conv_forward.1} parent=1 // pred_check_branch
      %26 = sbr.rel (0) target = $region17
    $region16: #{gated_d_conv_forward.1} parent=1 // pred_region
      %27 = dma.done [#allocation3], 5120
    $region17: #{gated_d_conv_forward.1} parent=1 // pred_fallthru
      _
    %v29 = vld [vmem:[%s0] sm:$0xff]
    %v30 = vld [vmem:[%s1] sm:$0x3f]
    %vm31 = vcmp.ge.f32.partialorder %v29, 0.0
    %v32 = vlaneseq
    %v33 = vshrl.u32 %v32, 7
    %v34 = vsub.s32 0, %v33
    %v35 = vrot.slane %v30, %v34
    %v36 = vmul.f32 %v35, %v29
    %v37 = vsel %vm31, %v29, %v36
    %v38 = vrot.slane %v37, 4
    %v39 = vadd.f32 %v37, %v38
    %v40 = vrot.slane %v39, 2
    %v41 = vadd.f32 %v39, %v40
    %v42 = vrot.slane %v41, 1
    %v43 = vadd.f32 %v41, %v42
    %v44 = vrcp.pop 8.0
    %v45 = vmul.f32 %v43, %v44
    %v46 = vsub.f32 %v37, %v45
    %v47 = vmul.f32 %v46, %v46
    %v48 = vrot.slane %v47, 4
    %v49 = vadd.f32 %v47, %v48
    %v50 = vrot.slane %v49, 2
    %v51 = vadd.f32 %v49, %v50
    %v52 = vrot.slane %v51, 1
    %v53 = vadd.f32 %v51, %v52
    %v54 = vmul.f32 %v53, %v44
    %v55 = vadd.f32 %v54, 1e-05
    %v56 = vrsqrt.pop %v55
    %v57 = vmul.f32 %v46, %v56
    %v58 = vlaneseq
    %v59 = vshrl.u32 %v58, 7
    %v60 = vsub.s32 1, %v59
    %v61 = vrot.slane %v30, %v60
    %v62 = vmul.f32 %v57, %v61
    %v63 = vlaneseq
    %v64 = vshrl.u32 %v63, 7
    %v65 = vsub.s32 2, %v64
    %v66 = vrot.slane %v30, %v65
    %v67 = vadd.f32 %v62, %v66
    %v68 = vlaneseq
    %v69 = vshrl.u32 %v68, 7
    %v70 = vsub.s32 3, %v69
    %v71 = vrot.slane %v30, %v70
    %v72 = vmul.f32 %v71, %v29
    %v73 = vsel %vm31, %v29, %v72
    %v74 = vrot.slane %v73, 4
    %v75 = vadd.f32 %v73, %v74
    %v76 = vrot.slane %v75, 2
    %v77 = vadd.f32 %v75, %v76
    %v78 = vrot.slane %v77, 1
    %v79 = vadd.f32 %v77, %v78
    %v80 = vmul.f32 %v79, %v44
    %v81 = vsub.f32 %v73, %v80
    %v82 = vmul.f32 %v81, %v81
    %v83 = vrot.slane %v82, 4
    %v84 = vadd.f32 %v82, %v83
    %v85 = vrot.slane %v84, 2
    %v86 = vadd.f32 %v84, %v85
    %v87 = vrot.slane %v86, 1
    %v88 = vadd.f32 %v86, %v87
    %v89 = vmul.f32 %v88, %v44
    %v90 = vadd.f32 %v89, 1e-05
    %v91 = vrsqrt.pop %v90
    %v92 = vmul.f32 %v81, %v91
    %v93 = vlaneseq
    %v94 = vshrl.u32 %v93, 7
    %v95 = vsub.s32 4, %v94
    %v96 = vrot.slane %v30, %v95
    %v97 = vmul.f32 %v92, %v96
    %v98 = vlaneseq
    %v99 = vshrl.u32 %v98, 7
    %v100 = vsub.s32 5, %v99
    %v101 = vrot.slane %v30, %v100
    %v102 = vadd.f32 %v97, %v101
    %v103 = vpack.c.bf16 0.0, 0.0
    %v104 = vld [vmem:[#allocation2] sm:$0xf]
    %v105 = vld [vmem:[#allocation2 + $0x4] sm:$0xf]
    %v106 = vld [vmem:[#allocation2 + $0x8] sm:$0xf]
    %v107 = vld [vmem:[#allocation2 + $0xc] sm:$0xf]
    %v108 = vld [vmem:[#allocation2 + $0x10] sm:$0xf]
    %v109 = vld [vmem:[#allocation2 + $0x14] sm:$0xf]
    %v110 = vld [vmem:[#allocation2 + $0x18] sm:$0xf]
    %v111 = vld [vmem:[#allocation2 + $0x1c] sm:$0xf]
    %s112 = scalar_lea.vmem [#allocation2], 160
    %v113 = vld [vmem:[%s112] sm:$0xf]
    %v114 = vld [vmem:[%s112 + $0x4] sm:$0xf]
    %v115 = vld [vmem:[%s112 + $0x8] sm:$0xf]
    %v116 = vld [vmem:[%s112 + $0xc] sm:$0xf]
    %v117 = vld [vmem:[%s112 + $0x10] sm:$0xf]
    %v118 = vld [vmem:[%s112 + $0x14] sm:$0xf]
    %v119 = vld [vmem:[%s112 + $0x18] sm:$0xf]
    %v120 = vld [vmem:[%s112 + $0x1c] sm:$0xf]
    %v121 = vpack.c.bf16 %v67, 0.0
    %v122 = vpack.c.bf16 %v102, 0.0
    %s123 = scalar_lea.vmem [#allocation2], 32
    %v124 = vld [vmem:[%s123] sm:$0xf]
    %v125 = vld [vmem:[%s123 + $0x4] sm:$0xf]
    %v126 = vld [vmem:[%s123 + $0x8] sm:$0xf]
    %v127 = vld [vmem:[%s123 + $0xc] sm:$0xf]
    %v128 = vld [vmem:[%s123 + $0x10] sm:$0xf]
    %v129 = vld [vmem:[%s123 + $0x14] sm:$0xf]
    %v130 = vld [vmem:[%s123 + $0x18] sm:$0xf]
    %v131 = vld [vmem:[%s123 + $0x1c] sm:$0xf]
    %s132 = scalar_lea.vmem [#allocation2], 192
    %v133 = vld [vmem:[%s132] sm:$0xf]
    %v134 = vld [vmem:[%s132 + $0x4] sm:$0xf]
    %v135 = vld [vmem:[%s132 + $0x8] sm:$0xf]
    %v136 = vld [vmem:[%s132 + $0xc] sm:$0xf]
    %v137 = vld [vmem:[%s132 + $0x10] sm:$0xf]
    %v138 = vld [vmem:[%s132 + $0x14] sm:$0xf]
    %v139 = vld [vmem:[%s132 + $0x18] sm:$0xf]
    %v140 = vld [vmem:[%s132 + $0x1c] sm:$0xf]
    %v142 = vrot.slane %v121, 1
    %v151 = vunpack.c.l.b16 %v124
    %v152 = vunpack.c.l.b16 %v125
    %v153 = vunpack.c.l.b16 %v126
    %v154 = vunpack.c.l.b16 %v127
    %v155 = vunpack.c.l.b16 %v128
    %v156 = vunpack.c.l.b16 %v129
    %v157 = vunpack.c.l.b16 %v130
    %v158 = vunpack.c.l.b16 %v131
    %v159 = vpack.c.b16 %v152, %v151
    %v160 = vpack.c.b16 %v154, %v153
    %v161 = vpack.c.b16 %v156, %v155
    %v162 = vpack.c.b16 %v158, %v157
    %vm167 = vcmask 523264
    %v169 = vsel %vm167, %v142, 0
    %171 = vmatprep.subr.bf16.mxu0 0
    %172 = vmatpush1.bf16.msra.mxu0 0
    %173 = vmatprep.subr.bf16.mxu0 0
    %174 = vmatpush1.bf16.msra.mxu0 0
    %175 = vmatprep.subr.bf16.mxu0 0
    %176 = vmatpush1.bf16.msra.mxu0 0
    %177 = vmatprep.subr.bf16.mxu0 0
    %178 = vmatpush1.bf16.msra.mxu0 0
    %179 = vmatprep.subr.bf16.mxu0 0
    %180 = vmatpush1.bf16.msra.mxu0 %v162
    %181 = vmatprep.subr.bf16.mxu0 0
    %182 = vmatpush1.bf16.msra.mxu0 %v161
    %183 = vmatprep.subr.bf16.mxu0 0
    %184 = vmatpush1.bf16.msra.mxu0 %v160
    %185 = vmatprep.subr.bf16.mxu0 0
    %186 = vmatpush1.bf16.msra.mxu0 %v159
    %187 = vmatprep.subr.bf16.mxu0 0
    %188 = vmatpush2.bf16.msra.mxu0 0
    %189 = vmatprep.subr.bf16.mxu0 0
    %190 = vmatpush2.bf16.msra.mxu0 0
    %191 = vmatprep.subr.bf16.mxu0 0
    %192 = vmatpush2.bf16.msra.mxu0 0
    %193 = vmatprep.subr.bf16.mxu0 0
    %194 = vmatpush2.bf16.msra.mxu0 0
    %195 = vmatprep.subr.bf16.mxu0 0
    %196 = vmatpush2.bf16.msra.mxu0 0
    %197 = vmatprep.subr.bf16.mxu0 0
    %198 = vmatpush2.bf16.msra.mxu0 0
    %199 = vmatprep.subr.bf16.mxu0 0
    %200 = vmatpush2.bf16.msra.mxu0 0
    %201 = vmatprep.subr.bf16.mxu0 0
    %202 = vmatpush2.bf16.msra.mxu0 0
    %203 = vmatprep.mubr.bf16.mxu0 0
    %204 = vmatmul.mubr.bf16.gmra.mxu0 %v169
    %v205 = vpop.f32.mrf.mxu0
    %v206 = vadd.f32 0.0, %v205
    %v207 = vpop.f32.mrf.mxu0
    %v208 = vpop.f32.mrf.mxu0
    %v209 = vpop.f32.mrf.mxu0
    %210 = vdwg.mxu0
    %v219 = vunpack.c.l.b16 %v104
    %v220 = vunpack.c.l.b16 %v105
    %v221 = vunpack.c.l.b16 %v106
    %v222 = vunpack.c.l.b16 %v107
    %v223 = vunpack.c.l.b16 %v108
    %v224 = vunpack.c.l.b16 %v109
    %v225 = vunpack.c.l.b16 %v110
    %v226 = vunpack.c.l.b16 %v111
    %v227 = vpack.c.b16 %v220, %v219
    %v228 = vpack.c.b16 %v222, %v221
    %v229 = vpack.c.b16 %v224, %v223
    %v230 = vpack.c.b16 %v226, %v225
    %v236 = vsel %vm167, %v103, 0
    %238 = vmatprep.subr.bf16.mxu0 0
    %239 = vmatpush1.bf16.msra.mxu0 0
    %240 = vmatprep.subr.bf16.mxu0 0
    %241 = vmatpush1.bf16.msra.mxu0 0
    %242 = vmatprep.subr.bf16.mxu0 0
    %243 = vmatpush1.bf16.msra.mxu0 0
    %244 = vmatprep.subr.bf16.mxu0 0
    %245 = vmatpush1.bf16.msra.mxu0 0
    %246 = vmatprep.subr.bf16.mxu0 0
    %247 = vmatpush1.bf16.msra.mxu0 %v230
    %248 = vmatprep.subr.bf16.mxu0 0
    %249 = vmatpush1.bf16.msra.mxu0 %v229
    %250 = vmatprep.subr.bf16.mxu0 0
    %251 = vmatpush1.bf16.msra.mxu0 %v228
    %252 = vmatprep.subr.bf16.mxu0 0
    %253 = vmatpush1.bf16.msra.mxu0 %v227
    %254 = vmatprep.subr.bf16.mxu0 0
    %255 = vmatpush2.bf16.msra.mxu0 0
    %256 = vmatprep.subr.bf16.mxu0 0
    %257 = vmatpush2.bf16.msra.mxu0 0
    %258 = vmatprep.subr.bf16.mxu0 0
    %259 = vmatpush2.bf16.msra.mxu0 0
    %260 = vmatprep.subr.bf16.mxu0 0
    %261 = vmatpush2.bf16.msra.mxu0 0
    %262 = vmatprep.subr.bf16.mxu0 0
    %263 = vmatpush2.bf16.msra.mxu0 0
    %264 = vmatprep.subr.bf16.mxu0 0
    %265 = vmatpush2.bf16.msra.mxu0 0
    %266 = vmatprep.subr.bf16.mxu0 0
    %267 = vmatpush2.bf16.msra.mxu0 0
    %268 = vmatprep.subr.bf16.mxu0 0
    %269 = vmatpush2.bf16.msra.mxu0 0
    %270 = vmatprep.mubr.bf16.mxu0 0
    %271 = vmatmul.mubr.bf16.gmra.mxu0 %v236
    %v272 = vpop.f32.mrf.mxu0
    %v273 = vadd.f32 %v206, %v272
    %v274 = vpop.f32.mrf.mxu0
    %v275 = vpop.f32.mrf.mxu0
    %v276 = vpop.f32.mrf.mxu0
    %277 = vdwg.mxu0
    %v279 = vrot.slane %v122, 1
    %v288 = vunpack.c.l.b16 %v133
    %v289 = vunpack.c.l.b16 %v134
    %v290 = vunpack.c.l.b16 %v135
    %v291 = vunpack.c.l.b16 %v136
    %v292 = vunpack.c.l.b16 %v137
    %v293 = vunpack.c.l.b16 %v138
    %v294 = vunpack.c.l.b16 %v139
    %v295 = vunpack.c.l.b16 %v140
    %v296 = vpack.c.b16 %v289, %v288
    %v297 = vpack.c.b16 %v291, %v290
    %v298 = vpack.c.b16 %v293, %v292
    %v299 = vpack.c.b16 %v295, %v294
    %v305 = vsel %vm167, %v279, 0
    %307 = vmatprep.subr.bf16.mxu0 0
    %308 = vmatpush1.bf16.msra.mxu0 0
    %309 = vmatprep.subr.bf16.mxu0 0
    %310 = vmatpush1.bf16.msra.mxu0 0
    %311 = vmatprep.subr.bf16.mxu0 0
    %312 = vmatpush1.bf16.msra.mxu0 0
    %313 = vmatprep.subr.bf16.mxu0 0
    %314 = vmatpush1.bf16.msra.mxu0 0
    %315 = vmatprep.subr.bf16.mxu0 0
    %316 = vmatpush1.bf16.msra.mxu0 %v299
    %317 = vmatprep.subr.bf16.mxu0 0
    %318 = vmatpush1.bf16.msra.mxu0 %v298
    %319 = vmatprep.subr.bf16.mxu0 0
    %320 = vmatpush1.bf16.msra.mxu0 %v297
    %321 = vmatprep.subr.bf16.mxu0 0
    %322 = vmatpush1.bf16.msra.mxu0 %v296
    %323 = vmatprep.subr.bf16.mxu0 0
    %324 = vmatpush2.bf16.msra.mxu0 0
    %325 = vmatprep.subr.bf16.mxu0 0
    %326 = vmatpush2.bf16.msra.mxu0 0
    %327 = vmatprep.subr.bf16.mxu0 0
    %328 = vmatpush2.bf16.msra.mxu0 0
    %329 = vmatprep.subr.bf16.mxu0 0
    %330 = vmatpush2.bf16.msra.mxu0 0
    %331 = vmatprep.subr.bf16.mxu0 0
    %332 = vmatpush2.bf16.msra.mxu0 0
    %333 = vmatprep.subr.bf16.mxu0 0
    %334 = vmatpush2.bf16.msra.mxu0 0
    %335 = vmatprep.subr.bf16.mxu0 0
    %336 = vmatpush2.bf16.msra.mxu0 0
    %337 = vmatprep.subr.bf16.mxu0 0
    %338 = vmatpush2.bf16.msra.mxu0 0
    %339 = vmatprep.mubr.bf16.mxu0 0
    %340 = vmatmul.mubr.bf16.gmra.mxu0 %v305
    %v341 = vpop.f32.mrf.mxu0
    %v342 = vadd.f32 0.0, %v341
    %v343 = vpop.f32.mrf.mxu0
    %v344 = vpop.f32.mrf.mxu0
    %v345 = vpop.f32.mrf.mxu0
    %346 = vdwg.mxu0
    %v355 = vunpack.c.l.b16 %v113
    %v356 = vunpack.c.l.b16 %v114
    %v357 = vunpack.c.l.b16 %v115
    %v358 = vunpack.c.l.b16 %v116
    %v359 = vunpack.c.l.b16 %v117
    %v360 = vunpack.c.l.b16 %v118
    %v361 = vunpack.c.l.b16 %v119
    %v362 = vunpack.c.l.b16 %v120
    %v363 = vpack.c.b16 %v356, %v355
    %v364 = vpack.c.b16 %v358, %v357
    %v365 = vpack.c.b16 %v360, %v359
    %v366 = vpack.c.b16 %v362, %v361
    %371 = vmatprep.subr.bf16.mxu0 0
    %372 = vmatpush1.bf16.msra.mxu0 0
    %373 = vmatprep.subr.bf16.mxu0 0
    %374 = vmatpush1.bf16.msra.mxu0 0
    %375 = vmatprep.subr.bf16.mxu0 0
    %376 = vmatpush1.bf16.msra.mxu0 0
    %377 = vmatprep.subr.bf16.mxu0 0
    %378 = vmatpush1.bf16.msra.mxu0 0
    %379 = vmatprep.subr.bf16.mxu0 0
    %380 = vmatpush1.bf16.msra.mxu0 %v366
    %381 = vmatprep.subr.bf16.mxu0 0
    %382 = vmatpush1.bf16.msra.mxu0 %v365
    %383 = vmatprep.subr.bf16.mxu0 0
    %384 = vmatpush1.bf16.msra.mxu0 %v364
    %385 = vmatprep.subr.bf16.mxu0 0
    %386 = vmatpush1.bf16.msra.mxu0 %v363
    %387 = vmatprep.subr.bf16.mxu0 0
    %388 = vmatpush2.bf16.msra.mxu0 0
    %389 = vmatprep.subr.bf16.mxu0 0
    %390 = vmatpush2.bf16.msra.mxu0 0
    %391 = vmatprep.subr.bf16.mxu0 0
    %392 = vmatpush2.bf16.msra.mxu0 0
    %393 = vmatprep.subr.bf16.mxu0 0
    %394 = vmatpush2.bf16.msra.mxu0 0
    %395 = vmatprep.subr.bf16.mxu0 0
    %396 = vmatpush2.bf16.msra.mxu0 0
    %397 = vmatprep.subr.bf16.mxu0 0
    %398 = vmatpush2.bf16.msra.mxu0 0
    %399 = vmatprep.subr.bf16.mxu0 0
    %400 = vmatpush2.bf16.msra.mxu0 0
    %401 = vmatprep.subr.bf16.mxu0 0
    %402 = vmatpush2.bf16.msra.mxu0 0
    %403 = vmatprep.mubr.bf16.mxu0 0
    %404 = vmatmul.mubr.bf16.gmra.mxu0 %v236
    %v405 = vpop.f32.mrf.mxu0
    %v406 = vadd.f32 %v342, %v405
    %v407 = vpop.f32.mrf.mxu0
    %v408 = vpop.f32.mrf.mxu0
    %v409 = vpop.f32.mrf.mxu0
    %410 = vdwg.mxu0
    %411 = vrot.lane.b32.xlu0 %v142, 64
    %v412 = vpop.permute.xlu0 %411
    %v414 = vsel %vm167, %v412, 0
    %416 = vmatprep.subr.bf16.mxu0 0
    %417 = vmatpush1.bf16.msra.mxu0 0
    %418 = vmatprep.subr.bf16.mxu0 0
    %419 = vmatpush1.bf16.msra.mxu0 0
    %420 = vmatprep.subr.bf16.mxu0 0
    %421 = vmatpush1.bf16.msra.mxu0 0
    %422 = vmatprep.subr.bf16.mxu0 0
    %423 = vmatpush1.bf16.msra.mxu0 0
    %424 = vmatprep.subr.bf16.mxu0 0
    %425 = vmatpush1.bf16.msra.mxu0 %v162
    %426 = vmatprep.subr.bf16.mxu0 0
    %427 = vmatpush1.bf16.msra.mxu0 %v161
    %428 = vmatprep.subr.bf16.mxu0 0
    %429 = vmatpush1.bf16.msra.mxu0 %v160
    %430 = vmatprep.subr.bf16.mxu0 0
    %431 = vmatpush1.bf16.msra.mxu0 %v159
    %432 = vmatprep.subr.bf16.mxu0 0
    %433 = vmatpush2.bf16.msra.mxu0 0
    %434 = vmatprep.subr.bf16.mxu0 0
    %435 = vmatpush2.bf16.msra.mxu0 0
    %436 = vmatprep.subr.bf16.mxu0 0
    %437 = vmatpush2.bf16.msra.mxu0 0
    %438 = vmatprep.subr.bf16.mxu0 0
    %439 = vmatpush2.bf16.msra.mxu0 0
    %440 = vmatprep.subr.bf16.mxu0 0
    %441 = vmatpush2.bf16.msra.mxu0 0
    %442 = vmatprep.subr.bf16.mxu0 0
    %443 = vmatpush2.bf16.msra.mxu0 0
    %444 = vmatprep.subr.bf16.mxu0 0
    %445 = vmatpush2.bf16.msra.mxu0 0
    %446 = vmatprep.subr.bf16.mxu0 0
    %447 = vmatpush2.bf16.msra.mxu0 0
    %448 = vmatprep.mubr.bf16.mxu0 0
    %449 = vmatmul.mubr.bf16.gmra.mxu0 %v414
    %v450 = vpop.f32.mrf.mxu0
    %v451 = vadd.f32 0.0, %v450
    %v452 = vpop.f32.mrf.mxu0
    %v453 = vpop.f32.mrf.mxu0
    %v454 = vpop.f32.mrf.mxu0
    %455 = vdwg.mxu0
    %457 = vrot.lane.b32.xlu0 %v103, 64
    %v458 = vpop.permute.xlu0 %457
    %v460 = vsel %vm167, %v458, 0
    %462 = vmatprep.subr.bf16.mxu0 0
    %463 = vmatpush1.bf16.msra.mxu0 0
    %464 = vmatprep.subr.bf16.mxu0 0
    %465 = vmatpush1.bf16.msra.mxu0 0
    %466 = vmatprep.subr.bf16.mxu0 0
    %467 = vmatpush1.bf16.msra.mxu0 0
    %468 = vmatprep.subr.bf16.mxu0 0
    %469 = vmatpush1.bf16.msra.mxu0 0
    %470 = vmatprep.subr.bf16.mxu0 0
    %471 = vmatpush1.bf16.msra.mxu0 %v230
    %472 = vmatprep.subr.bf16.mxu0 0
    %473 = vmatpush1.bf16.msra.mxu0 %v229
    %474 = vmatprep.subr.bf16.mxu0 0
    %475 = vmatpush1.bf16.msra.mxu0 %v228
    %476 = vmatprep.subr.bf16.mxu0 0
    %477 = vmatpush1.bf16.msra.mxu0 %v227
    %478 = vmatprep.subr.bf16.mxu0 0
    %479 = vmatpush2.bf16.msra.mxu0 0
    %480 = vmatprep.subr.bf16.mxu0 0
    %481 = vmatpush2.bf16.msra.mxu0 0
    %482 = vmatprep.subr.bf16.mxu0 0
    %483 = vmatpush2.bf16.msra.mxu0 0
    %484 = vmatprep.subr.bf16.mxu0 0
    %485 = vmatpush2.bf16.msra.mxu0 0
    %486 = vmatprep.subr.bf16.mxu0 0
    %487 = vmatpush2.bf16.msra.mxu0 0
    %488 = vmatprep.subr.bf16.mxu0 0
    %489 = vmatpush2.bf16.msra.mxu0 0
    %490 = vmatprep.subr.bf16.mxu0 0
    %491 = vmatpush2.bf16.msra.mxu0 0
    %492 = vmatprep.subr.bf16.mxu0 0
    %493 = vmatpush2.bf16.msra.mxu0 0
    %494 = vmatprep.mubr.bf16.mxu0 0
    %495 = vmatmul.mubr.bf16.gmra.mxu0 %v460
    %v496 = vpop.f32.mrf.mxu0
    %v497 = vadd.f32 %v451, %v496
    %v498 = vpop.f32.mrf.mxu0
    %v499 = vpop.f32.mrf.mxu0
    %v500 = vpop.f32.mrf.mxu0
    %501 = vdwg.mxu0
    %502 = vrot.lane.b32.xlu0 %v279, 64
    %v503 = vpop.permute.xlu0 %502
    %v505 = vsel %vm167, %v503, 0
    %507 = vmatprep.subr.bf16.mxu0 0
    %508 = vmatpush1.bf16.msra.mxu0 0
    %509 = vmatprep.subr.bf16.mxu0 0
    %510 = vmatpush1.bf16.msra.mxu0 0
    %511 = vmatprep.subr.bf16.mxu0 0
    %512 = vmatpush1.bf16.msra.mxu0 0
    %513 = vmatprep.subr.bf16.mxu0 0
    %514 = vmatpush1.bf16.msra.mxu0 0
    %515 = vmatprep.subr.bf16.mxu0 0
    %516 = vmatpush1.bf16.msra.mxu0 %v299
    %517 = vmatprep.subr.bf16.mxu0 0
    %518 = vmatpush1.bf16.msra.mxu0 %v298
    %519 = vmatprep.subr.bf16.mxu0 0
    %520 = vmatpush1.bf16.msra.mxu0 %v297
    %521 = vmatprep.subr.bf16.mxu0 0
    %522 = vmatpush1.bf16.msra.mxu0 %v296
    %523 = vmatprep.subr.bf16.mxu0 0
    %524 = vmatpush2.bf16.msra.mxu0 0
    %525 = vmatprep.subr.bf16.mxu0 0
    %526 = vmatpush2.bf16.msra.mxu0 0
    %527 = vmatprep.subr.bf16.mxu0 0
    %528 = vmatpush2.bf16.msra.mxu0 0
    %529 = vmatprep.subr.bf16.mxu0 0
    %530 = vmatpush2.bf16.msra.mxu0 0
    %531 = vmatprep.subr.bf16.mxu0 0
    %532 = vmatpush2.bf16.msra.mxu0 0
    %533 = vmatprep.subr.bf16.mxu0 0
    %534 = vmatpush2.bf16.msra.mxu0 0
    %535 = vmatprep.subr.bf16.mxu0 0
    %536 = vmatpush2.bf16.msra.mxu0 0
    %537 = vmatprep.subr.bf16.mxu0 0
    %538 = vmatpush2.bf16.msra.mxu0 0
    %539 = vmatprep.mubr.bf16.mxu0 0
    %540 = vmatmul.mubr.bf16.gmra.mxu0 %v505
    %v541 = vpop.f32.mrf.mxu0
    %v542 = vadd.f32 0.0, %v541
    %v543 = vpop.f32.mrf.mxu0
    %v544 = vpop.f32.mrf.mxu0
    %v545 = vpop.f32.mrf.mxu0
    %546 = vdwg.mxu0
    %547 = vmatprep.subr.bf16.mxu0 0
    %548 = vmatpush1.bf16.msra.mxu0 0
    %549 = vmatprep.subr.bf16.mxu0 0
    %550 = vmatpush1.bf16.msra.mxu0 0
    %551 = vmatprep.subr.bf16.mxu0 0
    %552 = vmatpush1.bf16.msra.mxu0 0
    %553 = vmatprep.subr.bf16.mxu0 0
    %554 = vmatpush1.bf16.msra.mxu0 0
    %555 = vmatprep.subr.bf16.mxu0 0
    %556 = vmatpush1.bf16.msra.mxu0 %v366
    %557 = vmatprep.subr.bf16.mxu0 0
    %558 = vmatpush1.bf16.msra.mxu0 %v365
    %559 = vmatprep.subr.bf16.mxu0 0
    %560 = vmatpush1.bf16.msra.mxu0 %v364
    %561 = vmatprep.subr.bf16.mxu0 0
    %562 = vmatpush1.bf16.msra.mxu0 %v363
    %563 = vmatprep.subr.bf16.mxu0 0
    %564 = vmatpush2.bf16.msra.mxu0 0
    %565 = vmatprep.subr.bf16.mxu0 0
    %566 = vmatpush2.bf16.msra.mxu0 0
    %567 = vmatprep.subr.bf16.mxu0 0
    %568 = vmatpush2.bf16.msra.mxu0 0
    %569 = vmatprep.subr.bf16.mxu0 0
    %570 = vmatpush2.bf16.msra.mxu0 0
    %571 = vmatprep.subr.bf16.mxu0 0
    %572 = vmatpush2.bf16.msra.mxu0 0
    %573 = vmatprep.subr.bf16.mxu0 0
    %574 = vmatpush2.bf16.msra.mxu0 0
    %575 = vmatprep.subr.bf16.mxu0 0
    %576 = vmatpush2.bf16.msra.mxu0 0
    %577 = vmatprep.subr.bf16.mxu0 0
    %578 = vmatpush2.bf16.msra.mxu0 0
    %579 = vmatprep.mubr.bf16.mxu0 0
    %580 = vmatmul.mubr.bf16.gmra.mxu0 %v460
    %v581 = vpop.f32.mrf.mxu0
    %v582 = vadd.f32 %v542, %v581
    %v583 = vpop.f32.mrf.mxu0
    %v584 = vpop.f32.mrf.mxu0
    %v585 = vpop.f32.mrf.mxu0
    %586 = vdwg.mxu0
    %s587 = scalar_lea.vmem [#allocation2], 64
    %v588 = vld [vmem:[%s587] sm:$0xf]
    %v589 = vld [vmem:[%s587 + $0x4] sm:$0xf]
    %v590 = vld [vmem:[%s587 + $0x8] sm:$0xf]
    %v591 = vld [vmem:[%s587 + $0xc] sm:$0xf]
    %v592 = vld [vmem:[%s587 + $0x10] sm:$0xf]
    %v593 = vld [vmem:[%s587 + $0x14] sm:$0xf]
    %v594 = vld [vmem:[%s587 + $0x18] sm:$0xf]
    %v595 = vld [vmem:[%s587 + $0x1c] sm:$0xf]
    %s596 = scalar_lea.vmem [#allocation2], 224
    %v597 = vld [vmem:[%s596] sm:$0xf]
    %v598 = vld [vmem:[%s596 + $0x4] sm:$0xf]
    %v599 = vld [vmem:[%s596 + $0x8] sm:$0xf]
    %v600 = vld [vmem:[%s596 + $0xc] sm:$0xf]
    %v601 = vld [vmem:[%s596 + $0x10] sm:$0xf]
    %v602 = vld [vmem:[%s596 + $0x14] sm:$0xf]
    %v603 = vld [vmem:[%s596 + $0x18] sm:$0xf]
    %v604 = vld [vmem:[%s596 + $0x1c] sm:$0xf]
    %v605 = vrot.slane %v121, 2
    %v614 = vunpack.c.l.b16 %v588
    %v615 = vunpack.c.l.b16 %v589
    %v616 = vunpack.c.l.b16 %v590
    %v617 = vunpack.c.l.b16 %v591
    %v618 = vunpack.c.l.b16 %v592
    %v619 = vunpack.c.l.b16 %v593
    %v620 = vunpack.c.l.b16 %v594
    %v621 = vunpack.c.l.b16 %v595
    %v622 = vpack.c.b16 %v615, %v614
    %v623 = vpack.c.b16 %v617, %v616
    %v624 = vpack.c.b16 %v619, %v618
    %v625 = vpack.c.b16 %v621, %v620
    %v631 = vsel %vm167, %v605, 0
    %633 = vmatprep.subr.bf16.mxu0 0
    %634 = vmatpush1.bf16.msra.mxu0 0
    %635 = vmatprep.subr.bf16.mxu0 0
    %636 = vmatpush1.bf16.msra.mxu0 0
    %637 = vmatprep.subr.bf16.mxu0 0
    %638 = vmatpush1.bf16.msra.mxu0 0
    %639 = vmatprep.subr.bf16.mxu0 0
    %640 = vmatpush1.bf16.msra.mxu0 0
    %641 = vmatprep.subr.bf16.mxu0 0
    %642 = vmatpush1.bf16.msra.mxu0 %v625
    %643 = vmatprep.subr.bf16.mxu0 0
    %644 = vmatpush1.bf16.msra.mxu0 %v624
    %645 = vmatprep.subr.bf16.mxu0 0
    %646 = vmatpush1.bf16.msra.mxu0 %v623
    %647 = vmatprep.subr.bf16.mxu0 0
    %648 = vmatpush1.bf16.msra.mxu0 %v622
    %649 = vmatprep.subr.bf16.mxu0 0
    %650 = vmatpush2.bf16.msra.mxu0 0
    %651 = vmatprep.subr.bf16.mxu0 0
    %652 = vmatpush2.bf16.msra.mxu0 0
    %653 = vmatprep.subr.bf16.mxu0 0
    %654 = vmatpush2.bf16.msra.mxu0 0
    %655 = vmatprep.subr.bf16.mxu0 0
    %656 = vmatpush2.bf16.msra.mxu0 0
    %657 = vmatprep.subr.bf16.mxu0 0
    %658 = vmatpush2.bf16.msra.mxu0 0
    %659 = vmatprep.subr.bf16.mxu0 0
    %660 = vmatpush2.bf16.msra.mxu0 0
    %661 = vmatprep.subr.bf16.mxu0 0
    %662 = vmatpush2.bf16.msra.mxu0 0
    %663 = vmatprep.subr.bf16.mxu0 0
    %664 = vmatpush2.bf16.msra.mxu0 0
    %665 = vmatprep.mubr.bf16.mxu0 0
    %666 = vmatmul.mubr.bf16.gmra.mxu0 %v631
    %v667 = vpop.f32.mrf.mxu0
    %v668 = vadd.f32 0.0, %v667
    %v669 = vpop.f32.mrf.mxu0
    %v670 = vpop.f32.mrf.mxu0
    %v671 = vpop.f32.mrf.mxu0
    %672 = vdwg.mxu0
    %v673 = vadd.f32 %v273, %v668
    %v674 = vrot.slane %v122, 2
    %v683 = vunpack.c.l.b16 %v597
    %v684 = vunpack.c.l.b16 %v598
    %v685 = vunpack.c.l.b16 %v599
    %v686 = vunpack.c.l.b16 %v600
    %v687 = vunpack.c.l.b16 %v601
    %v688 = vunpack.c.l.b16 %v602
    %v689 = vunpack.c.l.b16 %v603
    %v690 = vunpack.c.l.b16 %v604
    %v691 = vpack.c.b16 %v684, %v683
    %v692 = vpack.c.b16 %v686, %v685
    %v693 = vpack.c.b16 %v688, %v687
    %v694 = vpack.c.b16 %v690, %v689
    %v700 = vsel %vm167, %v674, 0
    %702 = vmatprep.subr.bf16.mxu0 0
    %703 = vmatpush1.bf16.msra.mxu0 0
    %704 = vmatprep.subr.bf16.mxu0 0
    %705 = vmatpush1.bf16.msra.mxu0 0
    %706 = vmatprep.subr.bf16.mxu0 0
    %707 = vmatpush1.bf16.msra.mxu0 0
    %708 = vmatprep.subr.bf16.mxu0 0
    %709 = vmatpush1.bf16.msra.mxu0 0
    %710 = vmatprep.subr.bf16.mxu0 0
    %711 = vmatpush1.bf16.msra.mxu0 %v694
    %712 = vmatprep.subr.bf16.mxu0 0
    %713 = vmatpush1.bf16.msra.mxu0 %v693
    %714 = vmatprep.subr.bf16.mxu0 0
    %715 = vmatpush1.bf16.msra.mxu0 %v692
    %716 = vmatprep.subr.bf16.mxu0 0
    %717 = vmatpush1.bf16.msra.mxu0 %v691
    %718 = vmatprep.subr.bf16.mxu0 0
    %719 = vmatpush2.bf16.msra.mxu0 0
    %720 = vmatprep.subr.bf16.mxu0 0
    %721 = vmatpush2.bf16.msra.mxu0 0
    %722 = vmatprep.subr.bf16.mxu0 0
    %723 = vmatpush2.bf16.msra.mxu0 0
    %724 = vmatprep.subr.bf16.mxu0 0
    %725 = vmatpush2.bf16.msra.mxu0 0
    %726 = vmatprep.subr.bf16.mxu0 0
    %727 = vmatpush2.bf16.msra.mxu0 0
    %728 = vmatprep.subr.bf16.mxu0 0
    %729 = vmatpush2.bf16.msra.mxu0 0
    %730 = vmatprep.subr.bf16.mxu0 0
    %731 = vmatpush2.bf16.msra.mxu0 0
    %732 = vmatprep.subr.bf16.mxu0 0
    %733 = vmatpush2.bf16.msra.mxu0 0
    %734 = vmatprep.mubr.bf16.mxu0 0
    %735 = vmatmul.mubr.bf16.gmra.mxu0 %v700
    %v736 = vpop.f32.mrf.mxu0
    %v737 = vadd.f32 0.0, %v736
    %v738 = vpop.f32.mrf.mxu0
    %v739 = vpop.f32.mrf.mxu0
    %v740 = vpop.f32.mrf.mxu0
    %741 = vdwg.mxu0
    %v742 = vadd.f32 %v406, %v737
    %743 = vrot.lane.b32.xlu0 %v605, 64
    %v744 = vpop.permute.xlu0 %743
    %v746 = vsel %vm167, %v744, 0
    %748 = vmatprep.subr.bf16.mxu0 0
    %749 = vmatpush1.bf16.msra.mxu0 0
    %750 = vmatprep.subr.bf16.mxu0 0
    %751 = vmatpush1.bf16.msra.mxu0 0
    %752 = vmatprep.subr.bf16.mxu0 0
    %753 = vmatpush1.bf16.msra.mxu0 0
    %754 = vmatprep.subr.bf16.mxu0 0
    %755 = vmatpush1.bf16.msra.mxu0 0
    %756 = vmatprep.subr.bf16.mxu0 0
    %757 = vmatpush1.bf16.msra.mxu0 %v625
    %758 = vmatprep.subr.bf16.mxu0 0
    %759 = vmatpush1.bf16.msra.mxu0 %v624
    %760 = vmatprep.subr.bf16.mxu0 0
    %761 = vmatpush1.bf16.msra.mxu0 %v623
    %762 = vmatprep.subr.bf16.mxu0 0
    %763 = vmatpush1.bf16.msra.mxu0 %v622
    %764 = vmatprep.subr.bf16.mxu0 0
    %765 = vmatpush2.bf16.msra.mxu0 0
    %766 = vmatprep.subr.bf16.mxu0 0
    %767 = vmatpush2.bf16.msra.mxu0 0
    %768 = vmatprep.subr.bf16.mxu0 0
    %769 = vmatpush2.bf16.msra.mxu0 0
    %770 = vmatprep.subr.bf16.mxu0 0
    %771 = vmatpush2.bf16.msra.mxu0 0
    %772 = vmatprep.subr.bf16.mxu0 0
    %773 = vmatpush2.bf16.msra.mxu0 0
    %774 = vmatprep.subr.bf16.mxu0 0
    %775 = vmatpush2.bf16.msra.mxu0 0
    %776 = vmatprep.subr.bf16.mxu0 0
    %777 = vmatpush2.bf16.msra.mxu0 0
    %778 = vmatprep.subr.bf16.mxu0 0
    %779 = vmatpush2.bf16.msra.mxu0 0
    %780 = vmatprep.mubr.bf16.mxu0 0
    %781 = vmatmul.mubr.bf16.gmra.mxu0 %v746
    %v782 = vpop.f32.mrf.mxu0
    %v783 = vadd.f32 0.0, %v782
    %v784 = vpop.f32.mrf.mxu0
    %v785 = vpop.f32.mrf.mxu0
    %v786 = vpop.f32.mrf.mxu0
    %787 = vdwg.mxu0
    %v788 = vadd.f32 %v497, %v783
    %789 = vrot.lane.b32.xlu0 %v674, 64
    %v790 = vpop.permute.xlu0 %789
    %v792 = vsel %vm167, %v790, 0
    %794 = vmatprep.subr.bf16.mxu0 0
    %795 = vmatpush1.bf16.msra.mxu0 0
    %796 = vmatprep.subr.bf16.mxu0 0
    %797 = vmatpush1.bf16.msra.mxu0 0
    %798 = vmatprep.subr.bf16.mxu0 0
    %799 = vmatpush1.bf16.msra.mxu0 0
    %800 = vmatprep.subr.bf16.mxu0 0
    %801 = vmatpush1.bf16.msra.mxu0 0
    %802 = vmatprep.subr.bf16.mxu0 0
    %803 = vmatpush1.bf16.msra.mxu0 %v694
    %804 = vmatprep.subr.bf16.mxu0 0
    %805 = vmatpush1.bf16.msra.mxu0 %v693
    %806 = vmatprep.subr.bf16.mxu0 0
    %807 = vmatpush1.bf16.msra.mxu0 %v692
    %808 = vmatprep.subr.bf16.mxu0 0
    %809 = vmatpush1.bf16.msra.mxu0 %v691
    %810 = vmatprep.subr.bf16.mxu0 0
    %811 = vmatpush2.bf16.msra.mxu0 0
    %812 = vmatprep.subr.bf16.mxu0 0
    %813 = vmatpush2.bf16.msra.mxu0 0
    %814 = vmatprep.subr.bf16.mxu0 0
    %815 = vmatpush2.bf16.msra.mxu0 0
    %816 = vmatprep.subr.bf16.mxu0 0
    %817 = vmatpush2.bf16.msra.mxu0 0
    %818 = vmatprep.subr.bf16.mxu0 0
    %819 = vmatpush2.bf16.msra.mxu0 0
    %820 = vmatprep.subr.bf16.mxu0 0
    %821 = vmatpush2.bf16.msra.mxu0 0
    %822 = vmatprep.subr.bf16.mxu0 0
    %823 = vmatpush2.bf16.msra.mxu0 0
    %824 = vmatprep.subr.bf16.mxu0 0
    %825 = vmatpush2.bf16.msra.mxu0 0
    %826 = vmatprep.mubr.bf16.mxu0 0
    %827 = vmatmul.mubr.bf16.gmra.mxu0 %v792
    %v828 = vpop.f32.mrf.mxu0
    %v829 = vadd.f32 0.0, %v828
    %v830 = vpop.f32.mrf.mxu0
    %v831 = vpop.f32.mrf.mxu0
    %v832 = vpop.f32.mrf.mxu0
    %833 = vdwg.mxu0
    %v834 = vadd.f32 %v582, %v829
    %s835 = scalar_lea.vmem [#allocation2], 96
    %v836 = vld [vmem:[%s835] sm:$0xf]
    %v837 = vld [vmem:[%s835 + $0x4] sm:$0xf]
    %v838 = vld [vmem:[%s835 + $0x8] sm:$0xf]
    %v839 = vld [vmem:[%s835 + $0xc] sm:$0xf]
    %v840 = vld [vmem:[%s835 + $0x10] sm:$0xf]
    %v841 = vld [vmem:[%s835 + $0x14] sm:$0xf]
    %v842 = vld [vmem:[%s835 + $0x18] sm:$0xf]
    %v843 = vld [vmem:[%s835 + $0x1c] sm:$0xf]
    %s844 = scalar_lea.vmem [#allocation2], 256
    %v845 = vld [vmem:[%s844] sm:$0xf]
    %v846 = vld [vmem:[%s844 + $0x4] sm:$0xf]
    %v847 = vld [vmem:[%s844 + $0x8] sm:$0xf]
    %v848 = vld [vmem:[%s844 + $0xc] sm:$0xf]
    %v849 = vld [vmem:[%s844 + $0x10] sm:$0xf]
    %v850 = vld [vmem:[%s844 + $0x14] sm:$0xf]
    %v851 = vld [vmem:[%s844 + $0x18] sm:$0xf]
    %v852 = vld [vmem:[%s844 + $0x1c] sm:$0xf]
    %v853 = vrot.slane %v121, 3
    %v862 = vunpack.c.l.b16 %v836
    %v863 = vunpack.c.l.b16 %v837
    %v864 = vunpack.c.l.b16 %v838
    %v865 = vunpack.c.l.b16 %v839
    %v866 = vunpack.c.l.b16 %v840
    %v867 = vunpack.c.l.b16 %v841
    %v868 = vunpack.c.l.b16 %v842
    %v869 = vunpack.c.l.b16 %v843
    %v870 = vpack.c.b16 %v863, %v862
    %v871 = vpack.c.b16 %v865, %v864
    %v872 = vpack.c.b16 %v867, %v866
    %v873 = vpack.c.b16 %v869, %v868
    %v879 = vsel %vm167, %v853, 0
    %881 = vmatprep.subr.bf16.mxu0 0
    %882 = vmatpush1.bf16.msra.mxu0 0
    %883 = vmatprep.subr.bf16.mxu0 0
    %884 = vmatpush1.bf16.msra.mxu0 0
    %885 = vmatprep.subr.bf16.mxu0 0
    %886 = vmatpush1.bf16.msra.mxu0 0
    %887 = vmatprep.subr.bf16.mxu0 0
    %888 = vmatpush1.bf16.msra.mxu0 0
    %889 = vmatprep.subr.bf16.mxu0 0
    %890 = vmatpush1.bf16.msra.mxu0 %v873
    %891 = vmatprep.subr.bf16.mxu0 0
    %892 = vmatpush1.bf16.msra.mxu0 %v872
    %893 = vmatprep.subr.bf16.mxu0 0
    %894 = vmatpush1.bf16.msra.mxu0 %v871
    %895 = vmatprep.subr.bf16.mxu0 0
    %896 = vmatpush1.bf16.msra.mxu0 %v870
    %897 = vmatprep.subr.bf16.mxu0 0
    %898 = vmatpush2.bf16.msra.mxu0 0
    %899 = vmatprep.subr.bf16.mxu0 0
    %900 = vmatpush2.bf16.msra.mxu0 0
    %901 = vmatprep.subr.bf16.mxu0 0
    %902 = vmatpush2.bf16.msra.mxu0 0
    %903 = vmatprep.subr.bf16.mxu0 0
    %904 = vmatpush2.bf16.msra.mxu0 0
    %905 = vmatprep.subr.bf16.mxu0 0
    %906 = vmatpush2.bf16.msra.mxu0 0
    %907 = vmatprep.subr.bf16.mxu0 0
    %908 = vmatpush2.bf16.msra.mxu0 0
    %909 = vmatprep.subr.bf16.mxu0 0
    %910 = vmatpush2.bf16.msra.mxu0 0
    %911 = vmatprep.subr.bf16.mxu0 0
    %912 = vmatpush2.bf16.msra.mxu0 0
    %913 = vmatprep.mubr.bf16.mxu0 0
    %914 = vmatmul.mubr.bf16.gmra.mxu0 %v879
    %v915 = vpop.f32.mrf.mxu0
    %v916 = vadd.f32 0.0, %v915
    %v917 = vpop.f32.mrf.mxu0
    %v918 = vpop.f32.mrf.mxu0
    %v919 = vpop.f32.mrf.mxu0
    %920 = vdwg.mxu0
    %v921 = vadd.f32 %v673, %v916
    %v922 = vrot.slane %v122, 3
    %v931 = vunpack.c.l.b16 %v845
    %v932 = vunpack.c.l.b16 %v846
    %v933 = vunpack.c.l.b16 %v847
    %v934 = vunpack.c.l.b16 %v848
    %v935 = vunpack.c.l.b16 %v849
    %v936 = vunpack.c.l.b16 %v850
    %v937 = vunpack.c.l.b16 %v851
    %v938 = vunpack.c.l.b16 %v852
    %v939 = vpack.c.b16 %v932, %v931
    %v940 = vpack.c.b16 %v934, %v933
    %v941 = vpack.c.b16 %v936, %v935
    %v942 = vpack.c.b16 %v938, %v937
    %v948 = vsel %vm167, %v922, 0
    %950 = vmatprep.subr.bf16.mxu0 0
    %951 = vmatpush1.bf16.msra.mxu0 0
    %952 = vmatprep.subr.bf16.mxu0 0
    %953 = vmatpush1.bf16.msra.mxu0 0
    %954 = vmatprep.subr.bf16.mxu0 0
    %955 = vmatpush1.bf16.msra.mxu0 0
    %956 = vmatprep.subr.bf16.mxu0 0
    %957 = vmatpush1.bf16.msra.mxu0 0
    %958 = vmatprep.subr.bf16.mxu0 0
    %959 = vmatpush1.bf16.msra.mxu0 %v942
    %960 = vmatprep.subr.bf16.mxu0 0
    %961 = vmatpush1.bf16.msra.mxu0 %v941
    %962 = vmatprep.subr.bf16.mxu0 0
    %963 = vmatpush1.bf16.msra.mxu0 %v940
    %964 = vmatprep.subr.bf16.mxu0 0
    %965 = vmatpush1.bf16.msra.mxu0 %v939
    %966 = vmatprep.subr.bf16.mxu0 0
    %967 = vmatpush2.bf16.msra.mxu0 0
    %968 = vmatprep.subr.bf16.mxu0 0
    %969 = vmatpush2.bf16.msra.mxu0 0
    %970 = vmatprep.subr.bf16.mxu0 0
    %971 = vmatpush2.bf16.msra.mxu0 0
    %972 = vmatprep.subr.bf16.mxu0 0
    %973 = vmatpush2.bf16.msra.mxu0 0
    %974 = vmatprep.subr.bf16.mxu0 0
    %975 = vmatpush2.bf16.msra.mxu0 0
    %976 = vmatprep.subr.bf16.mxu0 0
    %977 = vmatpush2.bf16.msra.mxu0 0
    %978 = vmatprep.subr.bf16.mxu0 0
    %979 = vmatpush2.bf16.msra.mxu0 0
    %980 = vmatprep.subr.bf16.mxu0 0
    %981 = vmatpush2.bf16.msra.mxu0 0
    %982 = vmatprep.mubr.bf16.mxu0 0
    %983 = vmatmul.mubr.bf16.gmra.mxu0 %v948
    %v984 = vpop.f32.mrf.mxu0
    %v985 = vadd.f32 0.0, %v984
    %v986 = vpop.f32.mrf.mxu0
    %v987 = vpop.f32.mrf.mxu0
    %v988 = vpop.f32.mrf.mxu0
    %989 = vdwg.mxu0
    %v990 = vadd.f32 %v742, %v985
    %991 = vrot.lane.b32.xlu0 %v853, 64
    %v992 = vpop.permute.xlu0 %991
    %v994 = vsel %vm167, %v992, 0
    %996 = vmatprep.subr.bf16.mxu0 0
    %997 = vmatpush1.bf16.msra.mxu0 0
    %998 = vmatprep.subr.bf16.mxu0 0
    %999 = vmatpush1.bf16.msra.mxu0 0
    %1000 = vmatprep.subr.bf16.mxu0 0
    %1001 = vmatpush1.bf16.msra.mxu0 0
    %1002 = vmatprep.subr.bf16.mxu0 0
    %1003 = vmatpush1.bf16.msra.mxu0 0
    %1004 = vmatprep.subr.bf16.mxu0 0
    %1005 = vmatpush1.bf16.msra.mxu0 %v873
    %1006 = vmatprep.subr.bf16.mxu0 0
    %1007 = vmatpush1.bf16.msra.mxu0 %v872
    %1008 = vmatprep.subr.bf16.mxu0 0
    %1009 = vmatpush1.bf16.msra.mxu0 %v871
    %1010 = vmatprep.subr.bf16.mxu0 0
    %1011 = vmatpush1.bf16.msra.mxu0 %v870
    %1012 = vmatprep.subr.bf16.mxu0 0
    %1013 = vmatpush2.bf16.msra.mxu0 0
    %1014 = vmatprep.subr.bf16.mxu0 0
    %1015 = vmatpush2.bf16.msra.mxu0 0
    %1016 = vmatprep.subr.bf16.mxu0 0
    %1017 = vmatpush2.bf16.msra.mxu0 0
    %1018 = vmatprep.subr.bf16.mxu0 0
    %1019 = vmatpush2.bf16.msra.mxu0 0
    %1020 = vmatprep.subr.bf16.mxu0 0
    %1021 = vmatpush2.bf16.msra.mxu0 0
    %1022 = vmatprep.subr.bf16.mxu0 0
    %1023 = vmatpush2.bf16.msra.mxu0 0
    %1024 = vmatprep.subr.bf16.mxu0 0
    %1025 = vmatpush2.bf16.msra.mxu0 0
    %1026 = vmatprep.subr.bf16.mxu0 0
    %1027 = vmatpush2.bf16.msra.mxu0 0
    %1028 = vmatprep.mubr.bf16.mxu0 0
    %1029 = vmatmul.mubr.bf16.gmra.mxu0 %v994
    %v1030 = vpop.f32.mrf.mxu0
    %v1031 = vadd.f32 0.0, %v1030
    %v1032 = vpop.f32.mrf.mxu0
    %v1033 = vpop.f32.mrf.mxu0
    %v1034 = vpop.f32.mrf.mxu0
    %1035 = vdwg.mxu0
    %v1036 = vadd.f32 %v788, %v1031
    %1037 = vrot.lane.b32.xlu0 %v922, 64
    %v1038 = vpop.permute.xlu0 %1037
    %v1040 = vsel %vm167, %v1038, 0
    %1042 = vmatprep.subr.bf16.mxu0 0
    %1043 = vmatpush1.bf16.msra.mxu0 0
    %1044 = vmatprep.subr.bf16.mxu0 0
    %1045 = vmatpush1.bf16.msra.mxu0 0
    %1046 = vmatprep.subr.bf16.mxu0 0
    %1047 = vmatpush1.bf16.msra.mxu0 0
    %1048 = vmatprep.subr.bf16.mxu0 0
    %1049 = vmatpush1.bf16.msra.mxu0 0
    %1050 = vmatprep.subr.bf16.mxu0 0
    %1051 = vmatpush1.bf16.msra.mxu0 %v942
    %1052 = vmatprep.subr.bf16.mxu0 0
    %1053 = vmatpush1.bf16.msra.mxu0 %v941
    %1054 = vmatprep.subr.bf16.mxu0 0
    %1055 = vmatpush1.bf16.msra.mxu0 %v940
    %1056 = vmatprep.subr.bf16.mxu0 0
    %1057 = vmatpush1.bf16.msra.mxu0 %v939
    %1058 = vmatprep.subr.bf16.mxu0 0
    %1059 = vmatpush2.bf16.msra.mxu0 0
    %1060 = vmatprep.subr.bf16.mxu0 0
    %1061 = vmatpush2.bf16.msra.mxu0 0
    %1062 = vmatprep.subr.bf16.mxu0 0
    %1063 = vmatpush2.bf16.msra.mxu0 0
    %1064 = vmatprep.subr.bf16.mxu0 0
    %1065 = vmatpush2.bf16.msra.mxu0 0
    %1066 = vmatprep.subr.bf16.mxu0 0
    %1067 = vmatpush2.bf16.msra.mxu0 0
    %1068 = vmatprep.subr.bf16.mxu0 0
    %1069 = vmatpush2.bf16.msra.mxu0 0
    %1070 = vmatprep.subr.bf16.mxu0 0
    %1071 = vmatpush2.bf16.msra.mxu0 0
    %1072 = vmatprep.subr.bf16.mxu0 0
    %1073 = vmatpush2.bf16.msra.mxu0 0
    %1074 = vmatprep.mubr.bf16.mxu0 0
    %1075 = vmatmul.mubr.bf16.gmra.mxu0 %v1040
    %v1076 = vpop.f32.mrf.mxu0
    %v1077 = vadd.f32 0.0, %v1076
    %v1078 = vpop.f32.mrf.mxu0
    %v1079 = vpop.f32.mrf.mxu0
    %v1080 = vpop.f32.mrf.mxu0
    %1081 = vdwg.mxu0
    %v1082 = vadd.f32 %v834, %v1077
    %v1083 = vpack.c.bf16 %v67, %v67
    %v1084 = vpack.c.bf16 %v102, %v102
    %s1085 = scalar_lea.vmem [#allocation2], 128
    %v1086 = vld [vmem:[%s1085] sm:$0xf]
    %v1087 = vld [vmem:[%s1085 + $0x4] sm:$0xf]
    %v1088 = vld [vmem:[%s1085 + $0x8] sm:$0xf]
    %v1089 = vld [vmem:[%s1085 + $0xc] sm:$0xf]
    %v1090 = vld [vmem:[%s1085 + $0x10] sm:$0xf]
    %v1091 = vld [vmem:[%s1085 + $0x14] sm:$0xf]
    %v1092 = vld [vmem:[%s1085 + $0x18] sm:$0xf]
    %v1093 = vld [vmem:[%s1085 + $0x1c] sm:$0xf]
    %s1094 = scalar_lea.vmem [#allocation2], 288
    %v1095 = vld [vmem:[%s1094] sm:$0xf]
    %v1096 = vld [vmem:[%s1094 + $0x4] sm:$0xf]
    %v1097 = vld [vmem:[%s1094 + $0x8] sm:$0xf]
    %v1098 = vld [vmem:[%s1094 + $0xc] sm:$0xf]
    %v1099 = vld [vmem:[%s1094 + $0x10] sm:$0xf]
    %v1100 = vld [vmem:[%s1094 + $0x14] sm:$0xf]
    %v1101 = vld [vmem:[%s1094 + $0x18] sm:$0xf]
    %v1102 = vld [vmem:[%s1094 + $0x1c] sm:$0xf]
    %v1111 = vunpack.c.l.b16 %v1086
    %v1112 = vunpack.c.l.b16 %v1087
    %v1113 = vunpack.c.l.b16 %v1088
    %v1114 = vunpack.c.l.b16 %v1089
    %v1115 = vunpack.c.l.b16 %v1090
    %v1116 = vunpack.c.l.b16 %v1091
    %v1117 = vunpack.c.l.b16 %v1092
    %v1118 = vunpack.c.l.b16 %v1093
    %v1119 = vpack.c.b16 %v1112, %v1111
    %v1120 = vpack.c.b16 %v1114, %v1113
    %v1121 = vpack.c.b16 %v1116, %v1115
    %v1122 = vpack.c.b16 %v1118, %v1117
    %v1128 = vsel %vm167, %v1083, 0
    %1130 = vmatprep.subr.bf16.mxu0 0
    %1131 = vmatpush1.bf16.msra.mxu0 0
    %1132 = vmatprep.subr.bf16.mxu0 0
    %1133 = vmatpush1.bf16.msra.mxu0 0
    %1134 = vmatprep.subr.bf16.mxu0 0
    %1135 = vmatpush1.bf16.msra.mxu0 0
    %1136 = vmatprep.subr.bf16.mxu0 0
    %1137 = vmatpush1.bf16.msra.mxu0 0
    %1138 = vmatprep.subr.bf16.mxu0 0
    %1139 = vmatpush1.bf16.msra.mxu0 %v1122
    %1140 = vmatprep.subr.bf16.mxu0 0
    %1141 = vmatpush1.bf16.msra.mxu0 %v1121
    %1142 = vmatprep.subr.bf16.mxu0 0
    %1143 = vmatpush1.bf16.msra.mxu0 %v1120
    %1144 = vmatprep.subr.bf16.mxu0 0
    %1145 = vmatpush1.bf16.msra.mxu0 %v1119
    %1146 = vmatprep.subr.bf16.mxu0 0
    %1147 = vmatpush2.bf16.msra.mxu0 0
    %1148 = vmatprep.subr.bf16.mxu0 0
    %1149 = vmatpush2.bf16.msra.mxu0 0
    %1150 = vmatprep.subr.bf16.mxu0 0
    %1151 = vmatpush2.bf16.msra.mxu0 0
    %1152 = vmatprep.subr.bf16.mxu0 0
    %1153 = vmatpush2.bf16.msra.mxu0 0
    %1154 = vmatprep.subr.bf16.mxu0 0
    %1155 = vmatpush2.bf16.msra.mxu0 0
    %1156 = vmatprep.subr.bf16.mxu0 0
    %1157 = vmatpush2.bf16.msra.mxu0 0
    %1158 = vmatprep.subr.bf16.mxu0 0
    %1159 = vmatpush2.bf16.msra.mxu0 0
    %1160 = vmatprep.subr.bf16.mxu0 0
    %1161 = vmatpush2.bf16.msra.mxu0 0
    %1162 = vmatprep.mubr.bf16.mxu0 0
    %1163 = vmatmul.mubr.bf16.gmra.mxu0 %v1128
    %v1164 = vpop.f32.mrf.mxu0
    %v1165 = vadd.f32 0.0, %v1164
    %v1166 = vpop.f32.mrf.mxu0
    %v1167 = vpop.f32.mrf.mxu0
    %v1168 = vpop.f32.mrf.mxu0
    %1169 = vdwg.mxu0
    %v1170 = vadd.f32 %v921, %v1165
    %v1179 = vunpack.c.l.b16 %v1095
    %v1180 = vunpack.c.l.b16 %v1096
    %v1181 = vunpack.c.l.b16 %v1097
    %v1182 = vunpack.c.l.b16 %v1098
    %v1183 = vunpack.c.l.b16 %v1099
    %v1184 = vunpack.c.l.b16 %v1100
    %v1185 = vunpack.c.l.b16 %v1101
    %v1186 = vunpack.c.l.b16 %v1102
    %v1187 = vpack.c.b16 %v1180, %v1179
    %v1188 = vpack.c.b16 %v1182, %v1181
    %v1189 = vpack.c.b16 %v1184, %v1183
    %v1190 = vpack.c.b16 %v1186, %v1185
    %v1196 = vsel %vm167, %v1084, 0
    %1198 = vmatprep.subr.bf16.mxu0 0
    %1199 = vmatpush1.bf16.msra.mxu0 0
    %1200 = vmatprep.subr.bf16.mxu0 0
    %1201 = vmatpush1.bf16.msra.mxu0 0
    %1202 = vmatprep.subr.bf16.mxu0 0
    %1203 = vmatpush1.bf16.msra.mxu0 0
    %1204 = vmatprep.subr.bf16.mxu0 0
    %1205 = vmatpush1.bf16.msra.mxu0 0
    %1206 = vmatprep.subr.bf16.mxu0 0
    %1207 = vmatpush1.bf16.msra.mxu0 %v1190
    %1208 = vmatprep.subr.bf16.mxu0 0
    %1209 = vmatpush1.bf16.msra.mxu0 %v1189
    %1210 = vmatprep.subr.bf16.mxu0 0
    %1211 = vmatpush1.bf16.msra.mxu0 %v1188
    %1212 = vmatprep.subr.bf16.mxu0 0
    %1213 = vmatpush1.bf16.msra.mxu0 %v1187
    %1214 = vmatprep.subr.bf16.mxu0 0
    %1215 = vmatpush2.bf16.msra.mxu0 0
    %1216 = vmatprep.subr.bf16.mxu0 0
    %1217 = vmatpush2.bf16.msra.mxu0 0
    %1218 = vmatprep.subr.bf16.mxu0 0
    %1219 = vmatpush2.bf16.msra.mxu0 0
    %1220 = vmatprep.subr.bf16.mxu0 0
    %1221 = vmatpush2.bf16.msra.mxu0 0
    %1222 = vmatprep.subr.bf16.mxu0 0
    %1223 = vmatpush2.bf16.msra.mxu0 0
    %1224 = vmatprep.subr.bf16.mxu0 0
    %1225 = vmatpush2.bf16.msra.mxu0 0
    %1226 = vmatprep.subr.bf16.mxu0 0
    %1227 = vmatpush2.bf16.msra.mxu0 0
    %1228 = vmatprep.subr.bf16.mxu0 0
    %1229 = vmatpush2.bf16.msra.mxu0 0
    %1230 = vmatprep.mubr.bf16.mxu0 0
    %1231 = vmatmul.mubr.bf16.gmra.mxu0 %v1196
    %v1232 = vpop.f32.mrf.mxu0
    %v1233 = vadd.f32 0.0, %v1232
    %v1234 = vpop.f32.mrf.mxu0
    %v1235 = vpop.f32.mrf.mxu0
    %v1236 = vpop.f32.mrf.mxu0
    %1237 = vdwg.mxu0
    %v1238 = vadd.f32 %v990, %v1233
    %1240 = vrot.lane.b32.xlu0 %v1083, 64
    %v1241 = vpop.permute.xlu0 %1240
    %v1243 = vsel %vm167, %v1241, 0
    %1245 = vmatprep.subr.bf16.mxu0 0
    %1246 = vmatpush1.bf16.msra.mxu0 0
    %1247 = vmatprep.subr.bf16.mxu0 0
    %1248 = vmatpush1.bf16.msra.mxu0 0
    %1249 = vmatprep.subr.bf16.mxu0 0
    %1250 = vmatpush1.bf16.msra.mxu0 0
    %1251 = vmatprep.subr.bf16.mxu0 0
    %1252 = vmatpush1.bf16.msra.mxu0 0
    %1253 = vmatprep.subr.bf16.mxu0 0
    %1254 = vmatpush1.bf16.msra.mxu0 %v1122
    %1255 = vmatprep.subr.bf16.mxu0 0
    %1256 = vmatpush1.bf16.msra.mxu0 %v1121
    %1257 = vmatprep.subr.bf16.mxu0 0
    %1258 = vmatpush1.bf16.msra.mxu0 %v1120
    %1259 = vmatprep.subr.bf16.mxu0 0
    %1260 = vmatpush1.bf16.msra.mxu0 %v1119
    %1261 = vmatprep.subr.bf16.mxu0 0
    %1262 = vmatpush2.bf16.msra.mxu0 0
    %1263 = vmatprep.subr.bf16.mxu0 0
    %1264 = vmatpush2.bf16.msra.mxu0 0
    %1265 = vmatprep.subr.bf16.mxu0 0
    %1266 = vmatpush2.bf16.msra.mxu0 0
    %1267 = vmatprep.subr.bf16.mxu0 0
    %1268 = vmatpush2.bf16.msra.mxu0 0
    %1269 = vmatprep.subr.bf16.mxu0 0
    %1270 = vmatpush2.bf16.msra.mxu0 0
    %1271 = vmatprep.subr.bf16.mxu0 0
    %1272 = vmatpush2.bf16.msra.mxu0 0
    %1273 = vmatprep.subr.bf16.mxu0 0
    %1274 = vmatpush2.bf16.msra.mxu0 0
    %1275 = vmatprep.subr.bf16.mxu0 0
    %1276 = vmatpush2.bf16.msra.mxu0 0
    %1277 = vmatprep.mubr.bf16.mxu0 0
    %1278 = vmatmul.mubr.bf16.gmra.mxu0 %v1243
    %v1279 = vpop.f32.mrf.mxu0
    %v1280 = vadd.f32 0.0, %v1279
    %v1281 = vpop.f32.mrf.mxu0
    %v1282 = vpop.f32.mrf.mxu0
    %v1283 = vpop.f32.mrf.mxu0
    %1284 = vdwg.mxu0
    %v1285 = vadd.f32 %v1036, %v1280
    %1287 = vrot.lane.b32.xlu0 %v1084, 64
    %v1288 = vpop.permute.xlu0 %1287
    %v1290 = vsel %vm167, %v1288, 0
    %1292 = vmatprep.subr.bf16.mxu0 0
    %1293 = vmatpush1.bf16.msra.mxu0 0
    %1294 = vmatprep.subr.bf16.mxu0 0
    %1295 = vmatpush1.bf16.msra.mxu0 0
    %1296 = vmatprep.subr.bf16.mxu0 0
    %1297 = vmatpush1.bf16.msra.mxu0 0
    %1298 = vmatprep.subr.bf16.mxu0 0
    %1299 = vmatpush1.bf16.msra.mxu0 0
    %1300 = vmatprep.subr.bf16.mxu0 0
    %1301 = vmatpush1.bf16.msra.mxu0 %v1190
    %1302 = vmatprep.subr.bf16.mxu0 0
    %1303 = vmatpush1.bf16.msra.mxu0 %v1189
    %1304 = vmatprep.subr.bf16.mxu0 0
    %1305 = vmatpush1.bf16.msra.mxu0 %v1188
    %1306 = vmatprep.subr.bf16.mxu0 0
    %1307 = vmatpush1.bf16.msra.mxu0 %v1187
    %1308 = vmatprep.subr.bf16.mxu0 0
    %1309 = vmatpush2.bf16.msra.mxu0 0
    %1310 = vmatprep.subr.bf16.mxu0 0
    %1311 = vmatpush2.bf16.msra.mxu0 0
    %1312 = vmatprep.subr.bf16.mxu0 0
    %1313 = vmatpush2.bf16.msra.mxu0 0
    %1314 = vmatprep.subr.bf16.mxu0 0
    %1315 = vmatpush2.bf16.msra.mxu0 0
    %1316 = vmatprep.subr.bf16.mxu0 0
    %1317 = vmatpush2.bf16.msra.mxu0 0
    %1318 = vmatprep.subr.bf16.mxu0 0
    %1319 = vmatpush2.bf16.msra.mxu0 0
    %1320 = vmatprep.subr.bf16.mxu0 0
    %1321 = vmatpush2.bf16.msra.mxu0 0
    %1322 = vmatprep.subr.bf16.mxu0 0
    %1323 = vmatpush2.bf16.msra.mxu0 0
    %1324 = vmatprep.mubr.bf16.mxu0 0
    %1325 = vmatmul.mubr.bf16.gmra.mxu0 %v1290
    %v1326 = vpop.f32.mrf.mxu0
    %v1327 = vadd.f32 0.0, %v1326
    %v1328 = vpop.f32.mrf.mxu0
    %v1329 = vpop.f32.mrf.mxu0
    %v1330 = vpop.f32.mrf.mxu0
    %1331 = vdwg.mxu0
    %v1332 = vadd.f32 %v1082, %v1327
    %1334 = vrot.lane.b32.xlu0 %v1285, 64
    %v1335 = vpop.permute.xlu0 %1334
    %v1337 = vsel %vm167, %v1170, %v1335
    %1339 = vrot.lane.b32.xlu0 %v1332, 64
    %v1340 = vpop.permute.xlu0 %1339
    %v1342 = vsel %vm167, %v1238, %v1340
    %v1343 = vxor.u32 %v1342, 2147483648
    %v1344 = vmul.f32 %v1343, 1.442695
    %v1345 = vpow.pop %v1344
    %v1346 = vadd.f32 %v1345, 1.0
    %v1347 = vrcp.pop %v1346
    %v1348 = vmul.f32 1.0, %v1347
    %v1349 = vmul.f32 %v1337, %v1348
    %1350 = vst [vmem:[%s3] sm:$0xff] %v1349
    // Predicated region
    $region18: #{gated_d_conv_forward.1} parent=1 // pred_check
      _
    $region19: #{gated_d_conv_forward.1} parent=1 // pred_check_branch
      %1352 = sbr.rel (0) target = $region21
    $region20: #{gated_d_conv_forward.1} parent=1 // pred_region
      _
    $region21: #{gated_d_conv_forward.1} parent=1 // pred_fallthru
      _
    // Predicated region
    $region22: #{gated_d_conv_forward.1} parent=1 // pred_check
      _
    $region23: #{gated_d_conv_forward.1} parent=1 // pred_check_branch
      %1354 = sbr.rel (0) target = $region25
    $region24: #{gated_d_conv_forward.1} parent=1 // pred_region
      _
    $region25: #{gated_d_conv_forward.1} parent=1 // pred_fallthru
      _
    %1355 = vsyncpa [#allocation3], 1

</llo_original>
